<compile_context>
chip_gen: v5e
topology: v5e:2x2
jax: 0.10.0
libtpu: 0.0.40
codegen_flags: <defaults>
</compile_context>

<pallas_src>
import functools

import numpy as np
import jax
import jax.numpy as jnp
from jax.experimental import pallas as pl
from jax.experimental.pallas import tpu as pltpu

_VMEM_LIMIT = 32 * 1024 * 1024  # explicit: v5e scoped default (16 MiB) is too small


def _tile(m, cap):
    """Full-extent tile for small axes (always a legal block dim), capped
    otherwise at an (8,128)-aligned size."""
    return m if m <= cap else cap


# --------- feats kernel: fused one-hot embedding matmul (one MXU push) -------

def _feats_kernel(fin_ref, table_ref, feats_ref, *, n_res, n_atom):
    # fin_ref:   (1, Tf, 8)  columns = [x, y, z, res_idx, 0, 0, 0, 0]
    # table_ref: (n_res + n_atom, rd + ad) block-diagonal fused embedding table
    # feats_ref: (1, Tf, rd + ad + 3)
    tf_ = fin_ref.shape[1]
    n_emb = table_ref.shape[0]

    a = fin_ref[0]                                # (Tf, 8)
    coors = a[:, 0:3]                             # (Tf, 3)
    res_id = a[:, 3:4].astype(jnp.int32)          # (Tf, 1) residue type

    row0 = pl.program_id(1) * tf_                 # global atom row offset
    rows = jax.lax.broadcasted_iota(jnp.int32, (tf_, 1), 0) + row0      # (Tf,1)
    atom_col = rows % n_atom + n_res                                     # (Tf,1)
    cols = jax.lax.broadcasted_iota(jnp.int32, (1, n_emb), 1)            # (1, K)

    # (Tf,1) vs (1,K) broadcast compares; exactly two hits per row.
    onehot = ((cols == res_id) | (cols == atom_col)).astype(jnp.float32)  # (Tf,K)
    emb = jnp.dot(onehot, table_ref[...],
                  preferred_element_type=jnp.float32)                     # (Tf,rd+ad)
    feats_ref[0] = jnp.concatenate([emb, coors], axis=-1).astype(feats_ref.dtype)


# --------- edge kernel: Gram-form dist^2 on centered coords, bool output -----

def _edge_kernel(arow_ref, bcol_ref, edge_ref, *, thresh):
    # arow_ref: (1, Tr, 8)      rows  = [cx, cy, cz, |c|^2, 1, 0, 0, 0]
    # bcol_ref: (1, gj, 8, Tc)  resident; cols = [-2cx, -2cy, -2cz, 1, |c|^2, 0,0,0]
    # edge_ref: (1, Tr, Tc) bool
    j = pl.program_id(2)
    b = bcol_ref[0, j]                                            # (8, Tc)
    d2 = jnp.dot(arow_ref[0], b, preferred_element_type=jnp.float32)
    edge_ref[0] = (d2 < thresh).astype(edge_ref.dtype)


def _forward(aa, pos14, atom_mask, res_table, atom_table, max_dist):
    N, L = aa.shape
    n_res, rd = res_table.shape
    n_atom, ad = atom_table.shape
    M = L * n_atom
    D = rd + ad + 3

    coors = pos14.reshape(N, M, 3).astype(jnp.float32)
    mask = atom_mask.reshape(N, M)

    # ------------------------- feats ----------------------------------------
    Tf = _tile(M, 256)
    gf = pl.cdiv(M, Tf)
    Mpf = gf * Tf

    res_idx = jnp.repeat(aa.astype(jnp.float32), n_atom, axis=1)          # (N, M)
    fin = jnp.concatenate(
        [coors, res_idx[..., None], jnp.zeros((N, M, 4), jnp.float32)], axis=-1)
    fin = jnp.pad(fin, ((0, 0), (0, Mpf - M), (0, 0)))                    # (N,Mpf,8)

    # block-diagonal fused embedding table (n_res + n_atom, rd + ad)
    table = jnp.zeros((n_res + n_atom, rd + ad), jnp.float32)
    table = table.at[:n_res, :rd].set(res_table.astype(jnp.float32))
    table = table.at[n_res:, rd:].set(atom_table.astype(jnp.float32))

    feats = pl.pallas_call(
        functools.partial(_feats_kernel, n_res=n_res, n_atom=n_atom),
        out_shape=jax.ShapeDtypeStruct((N, M, D), jnp.float32),
        grid_spec=pltpu.PrefetchScalarGridSpec(
            num_scalar_prefetch=0,
            grid=(N, gf),
            in_specs=[
                pl.BlockSpec((1, Tf, 8), lambda n, i: (n, i, 0)),
                pl.BlockSpec((n_res + n_atom, rd + ad), lambda n, i: (0, 0)),
            ],
            out_specs=pl.BlockSpec((1, Tf, D), lambda n, i: (n, i, 0)),
        ),
        compiler_params=pltpu.CompilerParams(
            dimension_semantics=("parallel", "parallel"),
            vmem_limit_bytes=_VMEM_LIMIT),
    )(fin, table)

    if float(max_dist) <= 0.0:
        return feats, mask, None

    # ------------------------- edge mask -------------------------------------
    Tr = _tile(M, 256)      # sublane (row) tile
    Tc = _tile(M, 4096)     # lane (column) tile — lane-wide output blocks
    gi, gj = pl.cdiv(M, Tr), pl.cdiv(M, Tc)
    Mpr, Mpc = gi * Tr, gj * Tc

    # per-sample centering: exact same distances, kills f32 cancellation in
    # the Gram form |ci|^2 + |cj|^2 - 2 ci.cj
    c = coors - jnp.mean(coors, axis=1, keepdims=True)
    sq = jnp.sum(c * c, axis=-1, keepdims=True)                           # (N,M,1)
    ones = jnp.ones_like(sq)
    zeros3 = jnp.zeros_like(c)

    arow = jnp.concatenate([c, sq, ones, zeros3], axis=-1)                # (N,M,8)
    arow = jnp.pad(arow, ((0, 0), (0, Mpr - M), (0, 0)))                  # (N,Mpr,8)

    bcol = jnp.concatenate([-2.0 * c, ones, sq, zeros3], axis=-1)         # (N,M,8)
    bcol = jnp.pad(bcol, ((0, 0), (0, Mpc - M), (0, 0)))                  # (N,Mpc,8)
    bcol = bcol.reshape(N, gj, Tc, 8).transpose(0, 1, 3, 2)               # (N,gj,8,Tc)

    edge_mask = pl.pallas_call(
        functools.partial(_edge_kernel, thresh=float(max_dist) * float(max_dist)),
        out_shape=jax.ShapeDtypeStruct((N, M, M), jnp.bool_),
        grid_spec=pltpu.PrefetchScalarGridSpec(
            num_scalar_prefetch=0,
            grid=(N, gi, gj),
            in_specs=[
                # row-side augmented coords: re-fetched only when i changes
                pl.BlockSpec((1, Tr, 8), lambda n, i, j: (n, i, 0)),
                # column-side augmented coords: fully VMEM-resident per batch
                pl.BlockSpec((1, gj, 8, Tc), lambda n, i, j: (n, 0, 0, 0)),
            ],
            out_specs=pl.BlockSpec((1, Tr, Tc), lambda n, i, j: (n, i, j)),
        ),
        compiler_params=pltpu.CompilerParams(
            dimension_semantics=("parallel", "parallel", "parallel"),
            vmem_limit_bytes=_VMEM_LIMIT),
    )(arow, bcol)

    return feats, mask, edge_mask


atom_encoder_forward = jax.jit(_forward, static_argnums=(5,))


if __name__ == "__main__":
    # module config: feat_dim=32 -> res_embed_dim=14, atom_embed_dim=15
    feat_dim = 32
    used_atom_num = 14
    max_dist = 2.0
    res_dim = (feat_dim - 3) // 2
    atom_dim = feat_dim - 3 - res_dim

    key = jax.random.PRNGKey(0)
    k1, k2, k3, k4, k5 = jax.random.split(key, 5)

    # deterministic synthetic Embedding tables
    res_table = jax.random.normal(k1, (21, res_dim), jnp.float32)
    atom_table = jax.random.normal(k2, (used_atom_num, atom_dim), jnp.float32)

    # inputs: N=2, L=8  ->  M = 112
    N, L = 2, 8
    aa = jax.random.randint(k3, (N, L), 0, 21, jnp.int32)
    pos14 = jax.random.normal(k4, (N, L, used_atom_num, 3), jnp.float32)
    atom_mask = (jax.random.uniform(k5, (N, L, used_atom_num)) > 0.3).astype(jnp.float32)

    feats, mask, edge_mask = atom_encoder_forward(
        aa, pos14, atom_mask, res_table, atom_table, max_dist)
    jax.block_until_ready(feats)
    jax.block_until_ready(edge_mask)

    # ---- pure-JAX reference ----
    M = L * used_atom_num
    res_idx = jnp.repeat(aa, used_atom_num, axis=1)
    atom_idx = jnp.tile(jnp.arange(used_atom_num), (N, L))
    coors = pos14.reshape(N, M, 3)
    feats_ref = jnp.concatenate(
        [res_table[res_idx], atom_table[atom_idx], coors], axis=-1)
    rel = coors[:, :, None, :] - coors[:, None, :, :]
    rel_dist = jnp.sum(rel ** 2, axis=-1)
    thresh = max_dist * max_dist
    edge_ref = rel_dist < thresh

    np.testing.assert_allclose(np.asarray(feats), np.asarray(feats_ref),
                               rtol=1e-5, atol=1e-5)
    np.testing.assert_allclose(np.asarray(mask),
                               np.asarray(atom_mask.reshape(N, M)))

    assert edge_mask.shape == (N, M, M) and edge_mask.dtype == jnp.bool_
    # The kernel evaluates d^2 via the Gram form on per-sample-centered
    # coordinates, so it can differ from the exact (ci-cj)^2 form only by tiny
    # float rounding; require exact agreement outside a small band around the
    # threshold and require that band to be a negligible fraction of pairs.
    band = np.abs(np.asarray(rel_dist) - thresh) > 1e-3
    assert np.array_equal(np.asarray(edge_mask)[band], np.asarray(edge_ref)[band])
    assert (~band).mean() < 0.01

    print("KERNEL_OK")
</pallas_src>

<mosaic_0001>
module attributes {stable_mosaic.version = 11 : i64} {
  func.func @_feats_kernel(%arg0: i32, %arg1: i32, %arg2: memref<1x112x8xf32, #tpu.memory_space<vmem>>, %arg3: memref<35x29xf32, #tpu.memory_space<vmem>>, %arg4: memref<1x112x32xf32, #tpu.memory_space<vmem>>) attributes {dimension_semantics = [#tpu.dimension_semantics<parallel>, #tpu.dimension_semantics<parallel>], iteration_bounds = array<i64: 2, 1>, scalar_prefetch = 0 : i64, scratch_operands = 0 : i64, tpu.core_type = #tpu.core_type<tc>, window_params = [{transform_indices = @transform_0, window_bounds = array<i64: 1, 112, 8>}, {pipeline_mode = #tpu.pipeline_mode<synchronous>, transform_indices = @transform_1, window_bounds = array<i64: 35, 29>}, {transform_indices = @transform_2, window_bounds = array<i64: 1, 112, 32>}]} {
    %c0 = arith.constant 0 : index
    %c0_0 = arith.constant 0 : index
    %c0_1 = arith.constant 0 : index
    %0 = vector.load %arg2[%c0, %c0_0, %c0_1] : memref<1x112x8xf32, #tpu.memory_space<vmem>>, vector<1x112x8xf32>
    %1 = vector.shape_cast %0 : vector<1x112x8xf32> to vector<112x8xf32>
    %2 = vector.extract_strided_slice %1 {offsets = [0, 0], sizes = [112, 3], strides = [1, 1]} : vector<112x8xf32> to vector<112x3xf32>
    %3 = vector.extract_strided_slice %1 {offsets = [0, 3], sizes = [112, 1], strides = [1, 1]} : vector<112x8xf32> to vector<112x1xf32>
    %4 = arith.fptosi %3 : vector<112x1xf32> to vector<112x1xi32>
    %c112_i32 = arith.constant 112 : i32
    %5 = arith.muli %arg1, %c112_i32 : i32
    %6 = tpu.iota {dimensions = array<i32: 0>} : vector<112x1xi32>
    %7 = vector.broadcast %5 : i32 to vector<112x1xi32>
    %8 = arith.addi %6, %7 : vector<112x1xi32>
    %c14_i32 = arith.constant 14 : i32
    %c0_i32 = arith.constant 0 : i32
    %9 = arith.cmpi eq, %c14_i32, %c0_i32 : i32
    %c1_i32 = arith.constant 1 : i32
    %10 = arith.select %9, %c1_i32, %c14_i32 : i32
    %11 = vector.broadcast %10 : i32 to vector<112x1xi32>
    %12 = arith.remsi %8, %11 : vector<112x1xi32>
    %c0_i32_2 = arith.constant 0 : i32
    %13 = vector.broadcast %c0_i32_2 : i32 to vector<112x1xi32>
    %14 = arith.cmpi ne, %12, %13 : vector<112x1xi32>
    %c0_i32_3 = arith.constant 0 : i32
    %15 = vector.broadcast %c0_i32_3 : i32 to vector<112x1xi32>
    %16 = arith.cmpi slt, %12, %15 : vector<112x1xi32>
    %c0_i32_4 = arith.constant 0 : i32
    %17 = arith.cmpi slt, %10, %c0_i32_4 : i32
    %18 = vector.broadcast %17 : i1 to vector<112x1xi1>
    %19 = vector.broadcast %18 : vector<112x1xi1> to vector<112x1xi1>
    %20 = arith.xori %16, %19 : vector<112x1xi1>
    %21 = arith.andi %20, %14 : vector<112x1xi1>
    %22 = vector.broadcast %10 : i32 to vector<112x1xi32>
    %23 = arith.addi %12, %22 : vector<112x1xi32>
    %24 = arith.select %21, %23, %12 : vector<112x1xi1>, vector<112x1xi32>
    %c21_i32 = arith.constant 21 : i32
    %25 = vector.broadcast %c21_i32 : i32 to vector<112x1xi32>
    %26 = arith.addi %24, %25 : vector<112x1xi32>
    %27 = tpu.iota {dimensions = array<i32: 1>} : vector<1x35xi32>
    %28 = vector.broadcast %27 : vector<1x35xi32> to vector<112x35xi32>
    %29 = vector.broadcast %4 : vector<112x1xi32> to vector<112x35xi32>
    %30 = arith.cmpi eq, %28, %29 : vector<112x35xi32>
    %31 = vector.broadcast %27 : vector<1x35xi32> to vector<112x35xi32>
    %32 = vector.broadcast %26 : vector<112x1xi32> to vector<112x35xi32>
    %33 = arith.cmpi eq, %31, %32 : vector<112x35xi32>
    %34 = arith.ori %30, %33 : vector<112x35xi1>
    %35 = arith.extui %34 : vector<112x35xi1> to vector<112x35xi32>
    %36 = arith.sitofp %35 : vector<112x35xi32> to vector<112x35xf32>
    %c0_5 = arith.constant 0 : index
    %c0_6 = arith.constant 0 : index
    %37 = vector.load %arg3[%c0_5, %c0_6] : memref<35x29xf32, #tpu.memory_space<vmem>>, vector<35x29xf32>
    %cst = arith.constant dense<0.000000e+00> : vector<112x29xf32>
    %38 = tpu.matmul %36, %37, %cst {dimension_numbers = #tpu.dot_dimension_numbers<[1], [0], [0], [1], [0, 0, 1, 1], [], []>} : vector<112x35xf32>, vector<35x29xf32>, vector<112x29xf32> -> vector<112x29xf32>
    %39 = tpu.concatenate %38, %2 in 1 : vector<112x29xf32>, vector<112x3xf32> -> vector<112x32xf32>
    %c0_7 = arith.constant 0 : index
    %c0_8 = arith.constant 0 : index
    %c0_9 = arith.constant 0 : index
    %40 = vector.load %arg4[%c0_7, %c0_8, %c0_9] : memref<1x112x32xf32, #tpu.memory_space<vmem>>, vector<1x112x32xf32>
    %41 = vector.shape_cast %40 : vector<1x112x32xf32> to vector<112x32xf32>
    %42 = vector.shape_cast %39 : vector<112x32xf32> to vector<1x112x32xf32>
    tpu.vector_store %arg4[%c0_7, %c0_8, %c0_9], %42 {strides = array<i32>} : memref<1x112x32xf32, #tpu.memory_space<vmem>>, vector<1x112x32xf32>,
    return
  }
  func.func @transform_0(%arg0: i32, %arg1: i32) -> (i32, i32, i32) {
    %c0_i32 = arith.constant 0 : i32
    %c0_i32_0 = arith.constant 0 : i32
    return %arg0, %arg1, %c0_i32 : i32, i32, i32
  }
  func.func @transform_1(%arg0: i32, %arg1: i32) -> (i32, i32) {
    %c0_i32 = arith.constant 0 : i32
    %c0_i32_0 = arith.constant 0 : i32
    %c0_i32_1 = arith.constant 0 : i32
    return %c0_i32, %c0_i32_0 : i32, i32
  }
  func.func @transform_2(%arg0: i32, %arg1: i32) -> (i32, i32, i32) {
    %c0_i32 = arith.constant 0 : i32
    %c0_i32_0 = arith.constant 0 : i32
    return %arg0, %arg1, %c0_i32 : i32, i32, i32
  }
}

module attributes {stable_mosaic.version = 11 : i64} {
  func.func @_edge_kernel(%arg0: i32, %arg1: i32, %arg2: i32, %arg3: memref<1x112x8xf32, #tpu.memory_space<vmem>>, %arg4: memref<1x1x8x112xf32, #tpu.memory_space<vmem>>, %arg5: memref<1x112x112xi32, #tpu.memory_space<vmem>>) attributes {dimension_semantics = [#tpu.dimension_semantics<parallel>, #tpu.dimension_semantics<parallel>, #tpu.dimension_semantics<parallel>], iteration_bounds = array<i64: 2, 1, 1>, scalar_prefetch = 0 : i64, scratch_operands = 0 : i64, tpu.core_type = #tpu.core_type<tc>, window_params = [{transform_indices = @transform_0, window_bounds = array<i64: 1, 112, 8>}, {transform_indices = @transform_1, window_bounds = array<i64: 1, 1, 8, 112>}, {transform_indices = @transform_2, window_bounds = array<i64: 1, 112, 112>}]} {
    %c0 = arith.constant 0 : index
    %0 = arith.index_cast %arg2 : i32 to index
    %c0_0 = arith.constant 0 : index
    %c0_1 = arith.constant 0 : index
    %1 = vector.load %arg4[%c0, %0, %c0_0, %c0_1] : memref<1x1x8x112xf32, #tpu.memory_space<vmem>>, vector<1x1x8x112xf32>
    %2 = vector.shape_cast %1 : vector<1x1x8x112xf32> to vector<8x112xf32>
    %c0_2 = arith.constant 0 : index
    %c0_3 = arith.constant 0 : index
    %c0_4 = arith.constant 0 : index
    %3 = vector.load %arg3[%c0_2, %c0_3, %c0_4] : memref<1x112x8xf32, #tpu.memory_space<vmem>>, vector<1x112x8xf32>
    %4 = vector.shape_cast %3 : vector<1x112x8xf32> to vector<112x8xf32>
    %cst = arith.constant dense<0.000000e+00> : vector<112x112xf32>
    %5 = tpu.matmul %4, %2, %cst {dimension_numbers = #tpu.dot_dimension_numbers<[1], [0], [0], [1], [0, 0, 1, 1], [], []>} : vector<112x8xf32>, vector<8x112xf32>, vector<112x112xf32> -> vector<112x112xf32>
    %cst_5 = arith.constant 4.000000e+00 : f32
    %6 = vector.broadcast %cst_5 : f32 to vector<112x112xf32>
    %7 = arith.cmpf olt, %5, %6 : vector<112x112xf32>
    %c0_6 = arith.constant 0 : index
    %c0_7 = arith.constant 0 : index
    %c0_8 = arith.constant 0 : index
    %8 = vector.load %arg5[%c0_6, %c0_7, %c0_8] : memref<1x112x112xi32, #tpu.memory_space<vmem>>, vector<1x112x112xi32>
    %9 = arith.extui %7 : vector<112x112xi1> to vector<112x112xi32>
    %10 = vector.shape_cast %8 : vector<1x112x112xi32> to vector<112x112xi32>
    %11 = vector.shape_cast %9 : vector<112x112xi32> to vector<1x112x112xi32>
    %cst_9 = arith.constant dense<0> : vector<112x112xi32>
    %12 = arith.cmpi ne, %10, %cst_9 : vector<112x112xi32>
    tpu.vector_store %arg5[%c0_6, %c0_7, %c0_8], %11 {strides = array<i32>} : memref<1x112x112xi32, #tpu.memory_space<vmem>>, vector<1x112x112xi32>,
    return
  }
  func.func @transform_0(%arg0: i32, %arg1: i32, %arg2: i32) -> (i32, i32, i32) {
    %c0_i32 = arith.constant 0 : i32
    %c0_i32_0 = arith.constant 0 : i32
    return %arg0, %arg1, %c0_i32 : i32, i32, i32
  }
  func.func @transform_1(%arg0: i32, %arg1: i32, %arg2: i32) -> (i32, i32, i32, i32) {
    %c0_i32 = arith.constant 0 : i32
    %c0_i32_0 = arith.constant 0 : i32
    %c0_i32_1 = arith.constant 0 : i32
    %c0_i32_2 = arith.constant 0 : i32
    return %arg0, %c0_i32, %c0_i32_0, %c0_i32_1 : i32, i32, i32, i32
  }
  func.func @transform_2(%arg0: i32, %arg1: i32, %arg2: i32) -> (i32, i32, i32) {
    %c0_i32 = arith.constant 0 : i32
    return %arg0, %arg1, %arg2 : i32, i32, i32
  }
}

</mosaic_0001>

<llo_original>
// kernel: _forward.3
$region0: #{_forward.3}
  #allocation0 [shape = 'u32[]', space=smem, size = 0x4, offset = 0x4, fixed_abs, tag = 'smem constant byte address 0x4 - core index']
  #allocation1 [shape = 'u32[72,128]{1,0:T(1,128)}', space=vmem, size = 0x9000, scoped, tag = 'internal scratch']
  %s0 = inlined_call_operand.vmem [shape: f32[2,112,8], index: 0, kind: input, shape index: {}]
  %s1 = inlined_call_operand.vmem [shape: f32[2,1,8,112], index: 1, kind: input, shape index: {}]
  %s2 = inlined_call_operand.vmem [shape: s32[2,112,112], index: 2, kind: output, shape index: {}]
  %s3 = sld [smem:[#allocation0]]
  $region41: #{_forward.3} parent=0
    _
  %s5 = ssub.s32 1, %s3
  %s6 = scalar_select 0, %s5, %s3
  loop: start=0, step=1, limit=4
  $region2: #{_forward.3} parent=0 // loop_pre_header
    _
  $region3: #{_forward.3} parent=0 // loop_header
    %s8 = sphi 0, %s12
    %p9 = scmp.ge.s32.totalorder %s8, 4
    %s15 = sphi 0, %s34
    %s16 = sphi 0, %s30
    %s17 = sphi 0, %s26
    %s18 = sphi 0, %s15
    %s19 = sphi 0, %s16
    %s20 = sphi 0, %s17
    %s21 = sphi 0, %s18
    %s22 = sphi 0, %s19
    %s23 = sphi 0, %s20
    %s39 = sphi 0, %s41
    %s42 = sphi 0, %s39
    %s43 = sphi 0, %s42
    %s59 = sphi 0, %s43
    %s65 = sphi 0, %s67
    %s68 = sphi 0, %s65
    %s69 = sphi 0, %s68
    %s85 = sphi 0, %s69
    %s95 = sphi 0, %s97
    %s98 = sphi 0, %s95
    %s99 = sphi 0, %s98
    %s115 = sphi 0, %s99
  $region4: #{_forward.3} parent=0 // loop_header_branch
    %11 = sbr.rel (%p9) target = $region8
  $region5: #{_forward.3} parent=0 // loop_body
    %s13 = ssub.s32 %s8, 1
    %s14 = ssub.s32 %s8, 2
    %s24 = sadd.s32 1, %s17
    %p25 = scmp.ge.s32.totalorder %s24, 1
    %s26 = scalar_select %p25, 0, %s24
    %s27 = sadd.s32 1, %s16
    %s28 = scalar_select %p25, %s27, %s16
    %p29 = scmp.ge.s32.totalorder %s28, 1
    %s30 = scalar_select %p29, 0, %s28
    %s31 = sadd.s32 1, %s15
    %s32 = scalar_select %p29, %s31, %s15
    %p33 = scmp.ge.s32.totalorder %s32, 2
    %s34 = scalar_select %p33, 0, %s32
    %s35 = ssub.s32 %s15, %s34
    %s36 = ssub.s32 %s16, %s30
    %s37 = sor.u32 %s35, %s36
    %p38 = scmp.eq.s32.totalorder %s37, 0
    %s40 = sadd.s32 %s39, 1
    %s41 = scalar_select %p38, %s39, %s40
    %p44 = pneg %p38
    %p45 = scmp.eq.s32.totalorder %s8, 1
    %p46 = por %p44, %p45
    %p47 = scmp.ne.s32.totalorder %s39, %s42
    %p48 = scmp.eq.s32.totalorder %s8, 0
    %p49 = por %p47, %p48
    %p50 = scmp.ne.s32.totalorder %s39, %s42
    %p51 = scmp.eq.s32.totalorder %s13, 1
    %p52 = por %p50, %p51
    %p53 = scmp.ne.s32.totalorder %s42, %s43
    %p54 = scmp.eq.s32.totalorder %s13, 0
    %p55 = por %p53, %p54
    %p56 = scmp.ne.s32.totalorder %s42, %s43
    %p57 = scmp.eq.s32.totalorder %s14, 1
    %p58 = por %p56, %p57
    %p60 = scmp.ne.s32.totalorder %s43, %s59
    %p61 = scmp.eq.s32.totalorder %s14, 0
    %p62 = por %p60, %p61
    %s63 = ssub.s32 %s15, %s34
    %p64 = scmp.eq.s32.totalorder %s63, 0
    %s66 = sadd.s32 %s65, 1
    %s67 = scalar_select %p64, %s65, %s66
    %p70 = pneg %p64
    %p71 = scmp.eq.s32.totalorder %s8, 1
    %p72 = por %p70, %p71
    %p73 = scmp.ne.s32.totalorder %s65, %s68
    %p74 = scmp.eq.s32.totalorder %s8, 0
    %p75 = por %p73, %p74
    %p76 = scmp.ne.s32.totalorder %s65, %s68
    %p77 = scmp.eq.s32.totalorder %s13, 1
    %p78 = por %p76, %p77
    %p79 = scmp.ne.s32.totalorder %s68, %s69
    %p80 = scmp.eq.s32.totalorder %s13, 0
    %p81 = por %p79, %p80
    %p82 = scmp.ne.s32.totalorder %s68, %s69
    %p83 = scmp.eq.s32.totalorder %s14, 1
    %p84 = por %p82, %p83
    %p86 = scmp.ne.s32.totalorder %s69, %s85
    %p87 = scmp.eq.s32.totalorder %s14, 0
    %p88 = por %p86, %p87
    %s89 = ssub.s32 %s15, %s34
    %s90 = ssub.s32 %s16, %s30
    %s91 = sor.u32 %s89, %s90
    %s92 = ssub.s32 %s17, %s26
    %s93 = sor.u32 %s91, %s92
    %p94 = scmp.eq.s32.totalorder %s93, 0
    %s96 = sadd.s32 %s95, 1
    %s97 = scalar_select %p94, %s95, %s96
    %p100 = pneg %p94
    %p101 = scmp.eq.s32.totalorder %s8, 1
    %p102 = por %p100, %p101
    %p103 = scmp.ne.s32.totalorder %s95, %s98
    %p104 = scmp.eq.s32.totalorder %s8, 0
    %p105 = por %p103, %p104
    %p106 = scmp.ne.s32.totalorder %s95, %s98
    %p107 = scmp.eq.s32.totalorder %s13, 1
    %p108 = por %p106, %p107
    %p109 = scmp.ne.s32.totalorder %s98, %s99
    %p110 = scmp.eq.s32.totalorder %s13, 0
    %p111 = por %p109, %p110
    %p112 = scmp.ne.s32.totalorder %s98, %s99
    %p113 = scmp.eq.s32.totalorder %s14, 1
    %p114 = por %p112, %p113
    %p116 = scmp.ne.s32.totalorder %s99, %s115
    %p117 = scmp.eq.s32.totalorder %s14, 0
    %p118 = por %p116, %p117
    %p119 = scmp.le.s32.totalorder 1, %s8
    %p120 = scmp.lt.s32.totalorder %s8, 3
    %p121 = pnand %p119, %p120
    %p122 = pneg %p121
    // Predicated region
    $region9: #{_forward.3} parent=5 // pred_check
      _
    $region10: #{_forward.3} parent=5 // pred_check_branch
      %124 = sbr.rel (%p121) target = $region12
    $region11: #{_forward.3} parent=5 // pred_region
      %s125 = ssub.s32 %s8, 1
    $region12: #{_forward.3} parent=5 // pred_fallthru
      _
    %p126 = scmp.lt.s32.totalorder %s8, 2
    // Predicated region
    $region13: #{_forward.3} parent=5 // pred_check
      %p127 = pneg %p126
    $region14: #{_forward.3} parent=5 // pred_check_branch
      %129 = sbr.rel (%p127) target = $region16
    $region15: #{_forward.3} parent=5 // pred_region
      // Predicated region
      $region17: #{_forward.3} parent=15 // pred_check
        %p130 = pneg %p49
      $region18: #{_forward.3} parent=15 // pred_check_branch
        %132 = sbr.rel (%p130) target = $region20
      $region19: #{_forward.3} parent=15 // pred_region
        %s133 = smul.u32 14, %s16
        %p134 = scmp.lt.s32.totalorder %s15, 1
        %s135 = scalar_select %p134, %s15, 1
        %p136 = scmp.lt.s32.totalorder %s133, 13
        %s137 = scalar_select %p136, %s133, 13
        %s138 = smul.addr %s135, 14
        %s139 = sadd.s32 %s137, %s138
        %s140 = smul.addr %s139, 8
        %s141 = scalar_lea.vmem %s0, %s140
        %s142 = smul.u32 14, %s16
      $region20: #{_forward.3} parent=15 // pred_fallthru
        _
      // Predicated region
      $region21: #{_forward.3} parent=15 // pred_check
        %p143 = pneg %p75
      $region22: #{_forward.3} parent=15 // pred_check_branch
        %145 = sbr.rel (%p143) target = $region24
      $region23: #{_forward.3} parent=15 // pred_region
        %p146 = scmp.lt.s32.totalorder %s15, 1
        %s147 = scalar_select %p146, %s15, 1
        %s148 = smul.addr %s147, 8
        %s149 = scalar_lea.vmem %s1, %s148
      $region24: #{_forward.3} parent=15 // pred_fallthru
        _
    $region16: #{_forward.3} parent=5 // pred_fallthru
      _
    %p150 = scmp.le.s32.totalorder 1, %s8
    %p151 = scmp.lt.s32.totalorder %s8, 3
    %p152 = pnand %p150, %p151
    %p153 = pneg %p152
    // Predicated region
    $region25: #{_forward.3} parent=5 // pred_check
      _
    $region26: #{_forward.3} parent=5 // pred_check_branch
      %155 = sbr.rel (%p152) target = $region28
    $region27: #{_forward.3} parent=5 // pred_region
      %s156 = ssub.s32 %s8, 1
      %s157 = smul.u32 14, %s19
      %p158 = scmp.lt.s32.totalorder %s18, 1
      %s159 = scalar_select %p158, %s18, 1
      %p160 = scmp.lt.s32.totalorder %s157, 13
      %s161 = scalar_select %p160, %s157, 13
      %s162 = smul.addr %s159, 14
      %s163 = sadd.s32 %s161, %s162
      %s164 = smul.addr %s163, 8
      %s165 = scalar_lea.vmem %s0, %s164
      %p166 = pneg %p55
      %p167 = pneg %p52
      %p168 = scmp.lt.s32.totalorder %s18, 1
      %s169 = scalar_select %p168, %s18, 1
      %s170 = smul.addr %s169, 8
      %s171 = scalar_lea.vmem %s1, %s170
      %p172 = pneg %p81
      %p173 = pneg %p78
      %p174 = pneg %p111
      %p175 = pneg %p108
      %s176 = smul.u32 14, %s19
      %p177 = scmp.lt.s32.totalorder %s18, 1
      %s178 = scalar_select %p177, %s18, 1
      %p179 = scmp.lt.s32.totalorder %s176, 13
      %s180 = scalar_select %p179, %s176, 13
      %p181 = scmp.lt.s32.totalorder %s20, 0
      %s182 = scalar_select %p181, %s20, 0
      %s183 = sadd.s32 %s182, %s180
      %s184 = smul.addr %s178, 14
      %s185 = sadd.s32 %s183, %s184
      %s186 = smul.addr %s185, 8
      %s187 = scalar_lea.vmem %s2, %s186
      %s188 = smul.u32 14, %s19
      %p189 = scmp.lt.s32.totalorder %s18, 1
      %s190 = scalar_select %p189, %s18, 1
      %p191 = scmp.lt.s32.totalorder %s188, 13
      %s192 = scalar_select %p191, %s188, 13
      %s193 = smul.addr %s190, 14
      %s194 = sadd.s32 %s192, %s193
      %s195 = smul.addr %s194, 8
      %s196 = scalar_lea.vmem %s0, %s195
      %s197 = smul.u32 14, %s19
      %p198 = scmp.lt.s32.totalorder %s18, 1
      %s199 = scalar_select %p198, %s18, 1
      %s200 = smul.addr %s199, 8
      %s201 = scalar_lea.vmem %s1, %s200
      %s202 = smul.u32 14, %s19
      %p203 = scmp.lt.s32.totalorder %s18, 1
      %s204 = scalar_select %p203, %s18, 1
      %p205 = scmp.lt.s32.totalorder %s202, 13
      %s206 = scalar_select %p205, %s202, 13
      %p207 = scmp.lt.s32.totalorder %s20, 0
      %s208 = scalar_select %p207, %s20, 0
      %s209 = sadd.s32 %s208, %s206
      %s210 = smul.addr %s204, 14
      %s211 = sadd.s32 %s209, %s210
      %s212 = smul.addr %s211, 8
      %s213 = scalar_lea.vmem %s2, %s212
      %s214 = smul.u32 14, %s19
      %s215 = smul.u32 %s20, 8
      %s216 = scalar_lea.vmem %s201, %s215
      %v217 = vld [vmem:[%s216] sm:$0xff]
      %v218 = vld [vmem:[%s196] sm:$0xff]
      %v219 = vld [vmem:[%s196 + $0x8] sm:$0xff]
      %v220 = vld [vmem:[%s196 + $0x10] sm:$0xff]
      %v221 = vld [vmem:[%s196 + $0x18] sm:$0xff]
      %v222 = vld [vmem:[%s196 + $0x20] sm:$0xff]
      %v223 = vld [vmem:[%s196 + $0x28] sm:$0xff]
      %v224 = vld [vmem:[%s196 + $0x30] sm:$0xff]
      %v225 = vld [vmem:[%s196 + $0x38] sm:$0xff]
      %v226 = vld [vmem:[%s196 + $0x40] sm:$0xff]
      %v227 = vld [vmem:[%s196 + $0x48] sm:$0xff]
      %v228 = vld [vmem:[%s196 + $0x50] sm:$0xff]
      %v229 = vld [vmem:[%s196 + $0x58] sm:$0xff]
      %v230 = vld [vmem:[%s196 + $0x60] sm:$0xff]
      %v231 = vld [vmem:[%s196 + $0x68] sm:$0xff]
      %vm232 = vcmask 64512
      %v234 = vsel %vm232, %v218, 0
      %v237 = vsel %vm232, %v219, 0
      %v240 = vsel %vm232, %v220, 0
      %v243 = vsel %vm232, %v221, 0
      %v246 = vsel %vm232, %v222, 0
      %v249 = vsel %vm232, %v223, 0
      %v252 = vsel %vm232, %v224, 0
      %v255 = vsel %vm232, %v225, 0
      %v258 = vsel %vm232, %v226, 0
      %v261 = vsel %vm232, %v227, 0
      %v264 = vsel %vm232, %v228, 0
      %v267 = vsel %vm232, %v229, 0
      %v270 = vsel %vm232, %v230, 0
      %v273 = vsel %vm232, %v231, 0
      %275 = vmatpush.msra.mxu0 0.0
      %276 = vmatpush.msra.mxu0 0.0
      %277 = vmatpush.msra.mxu0 0.0
      %278 = vmatpush.msra.mxu0 0.0
      %279 = vmatpush.msra.mxu0 0.0
      %280 = vmatpush.msra.mxu0 0.0
      %281 = vmatpush.msra.mxu0 0.0
      %282 = vmatpush.msra.mxu0 0.0
      %283 = vmatpush.msra.mxu0 0.0
      %284 = vmatpush.msra.mxu0 0.0
      %285 = vmatpush.msra.mxu0 0.0
      %286 = vmatpush.msra.mxu0 0.0
      %287 = vmatpush.msra.mxu0 0.0
      %288 = vmatpush.msra.mxu0 0.0
      %289 = vmatpush.msra.mxu0 0.0
      %290 = vmatpush.msra.mxu0 %v217
      %291 = vmatmul.f32.gmra.mxu0 %v234
      %v292 = vpop.f32.mrf.mxu0
      %v293 = vadd.f32 0.0, %v292
      %294 = vmatmul.f32.gmra.mxu0 %v237
      %v295 = vpop.f32.mrf.mxu0
      %v296 = vadd.f32 0.0, %v295
      %297 = vmatmul.f32.gmra.mxu0 %v240
      %v298 = vpop.f32.mrf.mxu0
      %v299 = vadd.f32 0.0, %v298
      %300 = vmatmul.f32.gmra.mxu0 %v243
      %v301 = vpop.f32.mrf.mxu0
      %v302 = vadd.f32 0.0, %v301
      %303 = vmatmul.f32.gmra.mxu0 %v246
      %v304 = vpop.f32.mrf.mxu0
      %v305 = vadd.f32 0.0, %v304
      %306 = vmatmul.f32.gmra.mxu0 %v249
      %v307 = vpop.f32.mrf.mxu0
      %v308 = vadd.f32 0.0, %v307
      %309 = vmatmul.f32.gmra.mxu0 %v252
      %v310 = vpop.f32.mrf.mxu0
      %v311 = vadd.f32 0.0, %v310
      %312 = vmatmul.f32.gmra.mxu0 %v255
      %v313 = vpop.f32.mrf.mxu0
      %v314 = vadd.f32 0.0, %v313
      %315 = vmatmul.f32.gmra.mxu0 %v258
      %v316 = vpop.f32.mrf.mxu0
      %v317 = vadd.f32 0.0, %v316
      %318 = vmatmul.f32.gmra.mxu0 %v261
      %v319 = vpop.f32.mrf.mxu0
      %v320 = vadd.f32 0.0, %v319
      %321 = vmatmul.f32.gmra.mxu0 %v264
      %v322 = vpop.f32.mrf.mxu0
      %v323 = vadd.f32 0.0, %v322
      %324 = vmatmul.f32.gmra.mxu0 %v267
      %v325 = vpop.f32.mrf.mxu0
      %v326 = vadd.f32 0.0, %v325
      %327 = vmatmul.f32.gmra.mxu0 %v270
      %v328 = vpop.f32.mrf.mxu0
      %v329 = vadd.f32 0.0, %v328
      %330 = vmatmul.f32.gmra.mxu0 %v273
      %v331 = vpop.f32.mrf.mxu0
      %v332 = vadd.f32 0.0, %v331
      %333 = vdwg.mxu0
      %vm334 = vcmp.lt.f32.partialorder %v293, 4.0
      %vm335 = vcmp.lt.f32.partialorder %v296, 4.0
      %vm336 = vcmp.lt.f32.partialorder %v299, 4.0
      %vm337 = vcmp.lt.f32.partialorder %v302, 4.0
      %vm338 = vcmp.lt.f32.partialorder %v305, 4.0
      %vm339 = vcmp.lt.f32.partialorder %v308, 4.0
      %vm340 = vcmp.lt.f32.partialorder %v311, 4.0
      %vm341 = vcmp.lt.f32.partialorder %v314, 4.0
      %vm342 = vcmp.lt.f32.partialorder %v317, 4.0
      %vm343 = vcmp.lt.f32.partialorder %v320, 4.0
      %vm344 = vcmp.lt.f32.partialorder %v323, 4.0
      %vm345 = vcmp.lt.f32.partialorder %v326, 4.0
      %vm346 = vcmp.lt.f32.partialorder %v329, 4.0
      %vm347 = vcmp.lt.f32.partialorder %v332, 4.0
      %v348 = vsel %vm334, 1, 0
      %v349 = vsel %vm335, 1, 0
      %v350 = vsel %vm336, 1, 0
      %v351 = vsel %vm337, 1, 0
      %v352 = vsel %vm338, 1, 0
      %v353 = vsel %vm339, 1, 0
      %v354 = vsel %vm340, 1, 0
      %v355 = vsel %vm341, 1, 0
      %v356 = vsel %vm342, 1, 0
      %v357 = vsel %vm343, 1, 0
      %v358 = vsel %vm344, 1, 0
      %v359 = vsel %vm345, 1, 0
      %v360 = vsel %vm346, 1, 0
      %v361 = vsel %vm347, 1, 0
      %vm362 = vcmask 916480
      %363 = vst.msk [vmem:[%s213] sm:$0xff] %vm362, %v348
      %364 = vst.msk [vmem:[%s213 + $0x8] sm:$0xff] %vm362, %v349
      %365 = vst.msk [vmem:[%s213 + $0x10] sm:$0xff] %vm362, %v350
      %366 = vst.msk [vmem:[%s213 + $0x18] sm:$0xff] %vm362, %v351
      %367 = vst.msk [vmem:[%s213 + $0x20] sm:$0xff] %vm362, %v352
      %368 = vst.msk [vmem:[%s213 + $0x28] sm:$0xff] %vm362, %v353
      %369 = vst.msk [vmem:[%s213 + $0x30] sm:$0xff] %vm362, %v354
      %370 = vst.msk [vmem:[%s213 + $0x38] sm:$0xff] %vm362, %v355
      %371 = vst.msk [vmem:[%s213 + $0x40] sm:$0xff] %vm362, %v356
      %372 = vst.msk [vmem:[%s213 + $0x48] sm:$0xff] %vm362, %v357
      %373 = vst.msk [vmem:[%s213 + $0x50] sm:$0xff] %vm362, %v358
      %374 = vst.msk [vmem:[%s213 + $0x58] sm:$0xff] %vm362, %v359
      %375 = vst.msk [vmem:[%s213 + $0x60] sm:$0xff] %vm362, %v360
      %376 = vst.msk [vmem:[%s213 + $0x68] sm:$0xff] %vm362, %v361
      %s377 = smul.u32 14, %s19
      %p378 = scmp.lt.s32.totalorder %s18, 1
      %s379 = scalar_select %p378, %s18, 1
      %p380 = scmp.lt.s32.totalorder %s377, 13
      %s381 = scalar_select %p380, %s377, 13
      %p382 = scmp.lt.s32.totalorder %s20, 0
      %s383 = scalar_select %p382, %s20, 0
      %s384 = sadd.s32 %s383, %s381
      %s385 = smul.addr %s379, 14
      %s386 = sadd.s32 %s384, %s385
      %s387 = smul.addr %s386, 8
      %s388 = scalar_lea.vmem %s2, %s387
      // Predicated region
      $region29: #{_forward.3} parent=27 // pred_check
        %p389 = pneg %p108
      $region30: #{_forward.3} parent=27 // pred_check_branch
        %391 = sbr.rel (%p389) target = $region32
      $region31: #{_forward.3} parent=27 // pred_region
        %s392 = smul.u32 14, %s19
      $region32: #{_forward.3} parent=27 // pred_fallthru
        _
    $region28: #{_forward.3} parent=5 // pred_fallthru
      _
    %p393 = scmp.le.s32.totalorder 2, %s8
    // Predicated region
    $region33: #{_forward.3} parent=5 // pred_check
      %p394 = pneg %p393
    $region34: #{_forward.3} parent=5 // pred_check_branch
      %396 = sbr.rel (%p394) target = $region36
    $region35: #{_forward.3} parent=5 // pred_region
      %s397 = ssub.s32 %s8, 2
      // Predicated region
      $region37: #{_forward.3} parent=35 // pred_check
        %p398 = pneg %p114
      $region38: #{_forward.3} parent=35 // pred_check_branch
        %400 = sbr.rel (%p398) target = $region40
      $region39: #{_forward.3} parent=35 // pred_region
        %s401 = smul.u32 14, %s22
        %p402 = scmp.lt.s32.totalorder %s21, 1
        %s403 = scalar_select %p402, %s21, 1
        %p404 = scmp.lt.s32.totalorder %s401, 13
        %s405 = scalar_select %p404, %s401, 13
        %p406 = scmp.lt.s32.totalorder %s23, 0
        %s407 = scalar_select %p406, %s23, 0
        %s408 = sadd.s32 %s407, %s405
        %s409 = smul.addr %s403, 14
        %s410 = sadd.s32 %s408, %s409
        %s411 = smul.addr %s410, 8
        %s412 = scalar_lea.vmem %s2, %s411
      $region40: #{_forward.3} parent=35 // pred_fallthru
        _
    $region36: #{_forward.3} parent=5 // pred_fallthru
      _
  $region6: #{_forward.3} parent=0 // loop_footer
    %s12 = sadd.s32 1, %s8
  $region7: #{_forward.3} parent=0 // loop_footer_branch
    %7 = sbr.rel target = $region3
  $region8: #{_forward.3} parent=0 // loop_exit
    _

// kernel: _forward.2
$region0: #{_forward.2}
  #allocation0 [shape = 'u32[]', space=smem, size = 0x4, offset = 0x4, fixed_abs, tag = 'smem constant byte address 0x4 - core index']
  #allocation1 [shape = 'u32[72,128]{1,0:T(1,128)}', space=vmem, size = 0x9000, scoped, tag = 'internal scratch']
  %s0 = inlined_call_operand.vmem [shape: f32[2,112,8], index: 0, kind: input, shape index: {}]
  %s1 = inlined_call_operand.vmem [shape: f32[35,29], index: 1, kind: input, shape index: {}]
  %s2 = inlined_call_operand.vmem [shape: f32[2,112,32], index: 2, kind: output, shape index: {}]
  %s3 = sld [smem:[#allocation0]]
  $region41: #{_forward.2} parent=0
    _
  %s5 = ssub.s32 1, %s3
  %s6 = scalar_select 0, %s5, %s3
  loop: start=0, step=1, limit=4
  $region2: #{_forward.2} parent=0 // loop_pre_header
    _
  $region3: #{_forward.2} parent=0 // loop_header
    %s8 = sphi 0, %s12
    %p9 = scmp.ge.s32.totalorder %s8, 4
    %s15 = sphi 0, %s27
    %s16 = sphi 0, %s23
    %s17 = sphi 0, %s15
    %s18 = sphi 0, %s16
    %s19 = sphi 0, %s17
    %s20 = sphi 0, %s18
    %s32 = sphi 0, %s34
    %s35 = sphi 0, %s32
    %s36 = sphi 0, %s35
    %s52 = sphi 0, %s36
    %s56 = sphi 0, %s56
    %s58 = sphi 0, %s56
    %s59 = sphi 0, %s58
    %s73 = sphi 0, %s59
    %s81 = sphi 0, %s83
    %s84 = sphi 0, %s81
    %s85 = sphi 0, %s84
    %s101 = sphi 0, %s85
  $region4: #{_forward.2} parent=0 // loop_header_branch
    %11 = sbr.rel (%p9) target = $region8
  $region5: #{_forward.2} parent=0 // loop_body
    %s13 = ssub.s32 %s8, 1
    %s14 = ssub.s32 %s8, 2
    %s21 = sadd.s32 1, %s16
    %p22 = scmp.ge.s32.totalorder %s21, 1
    %s23 = scalar_select %p22, 0, %s21
    %s24 = sadd.s32 1, %s15
    %s25 = scalar_select %p22, %s24, %s15
    %p26 = scmp.ge.s32.totalorder %s25, 2
    %s27 = scalar_select %p26, 0, %s25
    %s28 = ssub.s32 %s15, %s27
    %s29 = ssub.s32 %s16, %s23
    %s30 = sor.u32 %s28, %s29
    %p31 = scmp.eq.s32.totalorder %s30, 0
    %s33 = sadd.s32 %s32, 1
    %s34 = scalar_select %p31, %s32, %s33
    %p37 = pneg %p31
    %p38 = scmp.eq.s32.totalorder %s8, 1
    %p39 = por %p37, %p38
    %p40 = scmp.ne.s32.totalorder %s32, %s35
    %p41 = scmp.eq.s32.totalorder %s8, 0
    %p42 = por %p40, %p41
    %p43 = scmp.ne.s32.totalorder %s32, %s35
    %p44 = scmp.eq.s32.totalorder %s13, 1
    %p45 = por %p43, %p44
    %p46 = scmp.ne.s32.totalorder %s35, %s36
    %p47 = scmp.eq.s32.totalorder %s13, 0
    %p48 = por %p46, %p47
    %p49 = scmp.ne.s32.totalorder %s35, %s36
    %p50 = scmp.eq.s32.totalorder %s14, 1
    %p51 = por %p49, %p50
    %p53 = scmp.ne.s32.totalorder %s36, %s52
    %p54 = scmp.eq.s32.totalorder %s14, 0
    %p55 = por %p53, %p54
    %s57 = sadd.s32 %s56, 1
    %p60 = scmp.eq.s32.totalorder %s8, 1
    %p61 = scmp.ne.s32.totalorder %s56, %s58
    %p62 = scmp.eq.s32.totalorder %s8, 0
    %p63 = por %p61, %p62
    %p64 = scmp.ne.s32.totalorder %s56, %s58
    %p65 = scmp.eq.s32.totalorder %s13, 1
    %p66 = por %p64, %p65
    %p67 = scmp.ne.s32.totalorder %s58, %s59
    %p68 = scmp.eq.s32.totalorder %s13, 0
    %p69 = por %p67, %p68
    %p70 = scmp.ne.s32.totalorder %s58, %s59
    %p71 = scmp.eq.s32.totalorder %s14, 1
    %p72 = por %p70, %p71
    %p74 = scmp.ne.s32.totalorder %s59, %s73
    %p75 = scmp.eq.s32.totalorder %s14, 0
    %p76 = por %p74, %p75
    %s77 = ssub.s32 %s15, %s27
    %s78 = ssub.s32 %s16, %s23
    %s79 = sor.u32 %s77, %s78
    %p80 = scmp.eq.s32.totalorder %s79, 0
    %s82 = sadd.s32 %s81, 1
    %s83 = scalar_select %p80, %s81, %s82
    %p86 = pneg %p80
    %p87 = scmp.eq.s32.totalorder %s8, 1
    %p88 = por %p86, %p87
    %p89 = scmp.ne.s32.totalorder %s81, %s84
    %p90 = scmp.eq.s32.totalorder %s8, 0
    %p91 = por %p89, %p90
    %p92 = scmp.ne.s32.totalorder %s81, %s84
    %p93 = scmp.eq.s32.totalorder %s13, 1
    %p94 = por %p92, %p93
    %p95 = scmp.ne.s32.totalorder %s84, %s85
    %p96 = scmp.eq.s32.totalorder %s13, 0
    %p97 = por %p95, %p96
    %p98 = scmp.ne.s32.totalorder %s84, %s85
    %p99 = scmp.eq.s32.totalorder %s14, 1
    %p100 = por %p98, %p99
    %p102 = scmp.ne.s32.totalorder %s85, %s101
    %p103 = scmp.eq.s32.totalorder %s14, 0
    %p104 = por %p102, %p103
    %p105 = scmp.le.s32.totalorder 1, %s8
    %p106 = scmp.lt.s32.totalorder %s8, 3
    %p107 = pnand %p105, %p106
    %p108 = pneg %p107
    // Predicated region
    $region9: #{_forward.2} parent=5 // pred_check
      _
    $region10: #{_forward.2} parent=5 // pred_check_branch
      %110 = sbr.rel (%p107) target = $region12
    $region11: #{_forward.2} parent=5 // pred_region
      %s111 = ssub.s32 %s8, 1
      // Predicated region
      $region13: #{_forward.2} parent=11 // pred_check
        %p112 = pneg %p69
      $region14: #{_forward.2} parent=11 // pred_check_branch
        %114 = sbr.rel (%p112) target = $region16
      $region15: #{_forward.2} parent=11 // pred_region
        _
      $region16: #{_forward.2} parent=11 // pred_fallthru
        _
    $region12: #{_forward.2} parent=5 // pred_fallthru
      _
    %p115 = scmp.lt.s32.totalorder %s8, 2
    // Predicated region
    $region17: #{_forward.2} parent=5 // pred_check
      %p116 = pneg %p115
    $region18: #{_forward.2} parent=5 // pred_check_branch
      %118 = sbr.rel (%p116) target = $region20
    $region19: #{_forward.2} parent=5 // pred_region
      // Predicated region
      $region21: #{_forward.2} parent=19 // pred_check
        %p119 = pneg %p42
      $region22: #{_forward.2} parent=19 // pred_check_branch
        %121 = sbr.rel (%p119) target = $region24
      $region23: #{_forward.2} parent=19 // pred_region
        %s122 = smul.u32 14, %s16
        %p123 = scmp.lt.s32.totalorder %s15, 1
        %s124 = scalar_select %p123, %s15, 1
        %p125 = scmp.lt.s32.totalorder %s122, 13
        %s126 = scalar_select %p125, %s122, 13
        %s127 = smul.addr %s124, 14
        %s128 = sadd.s32 %s126, %s127
        %s129 = smul.addr %s128, 8
        %s130 = scalar_lea.vmem %s0, %s129
        %s131 = smul.u32 14, %s16
      $region24: #{_forward.2} parent=19 // pred_fallthru
        _
    $region20: #{_forward.2} parent=5 // pred_fallthru
      _
    %p132 = scmp.le.s32.totalorder 1, %s8
    %p133 = scmp.lt.s32.totalorder %s8, 3
    %p134 = pnand %p132, %p133
    %p135 = pneg %p134
    // Predicated region
    $region25: #{_forward.2} parent=5 // pred_check
      _
    $region26: #{_forward.2} parent=5 // pred_check_branch
      %137 = sbr.rel (%p134) target = $region28
    $region27: #{_forward.2} parent=5 // pred_region
      %s138 = ssub.s32 %s8, 1
      %s139 = smul.u32 14, %s18
      %p140 = scmp.lt.s32.totalorder %s17, 1
      %s141 = scalar_select %p140, %s17, 1
      %p142 = scmp.lt.s32.totalorder %s139, 13
      %s143 = scalar_select %p142, %s139, 13
      %s144 = smul.addr %s141, 14
      %s145 = sadd.s32 %s143, %s144
      %s146 = smul.addr %s145, 8
      %s147 = scalar_lea.vmem %s0, %s146
      %p148 = pneg %p48
      %p149 = pneg %p45
      %p150 = pneg %p69
      %p151 = pneg %p66
      %p152 = pneg %p97
      %p153 = pneg %p94
      %s154 = smul.u32 14, %s18
      %p155 = scmp.lt.s32.totalorder %s17, 1
      %s156 = scalar_select %p155, %s17, 1
      %p157 = scmp.lt.s32.totalorder %s154, 13
      %s158 = scalar_select %p157, %s154, 13
      %s159 = smul.addr %s156, 14
      %s160 = sadd.s32 %s158, %s159
      %s161 = smul.addr %s160, 8
      %s162 = scalar_lea.vmem %s2, %s161
      %s163 = smul.u32 14, %s18
      %p164 = scmp.lt.s32.totalorder %s17, 1
      %s165 = scalar_select %p164, %s17, 1
      %p166 = scmp.lt.s32.totalorder %s163, 13
      %s167 = scalar_select %p166, %s163, 13
      %s168 = smul.addr %s165, 14
      %s169 = sadd.s32 %s167, %s168
      %s170 = smul.addr %s169, 8
      %s171 = scalar_lea.vmem %s0, %s170
      %s172 = smul.u32 14, %s18
      %s173 = smul.u32 14, %s18
      %p174 = scmp.lt.s32.totalorder %s17, 1
      %s175 = scalar_select %p174, %s17, 1
      %p176 = scmp.lt.s32.totalorder %s173, 13
      %s177 = scalar_select %p176, %s173, 13
      %s178 = smul.addr %s175, 14
      %s179 = sadd.s32 %s177, %s178
      %s180 = smul.addr %s179, 8
      %s181 = scalar_lea.vmem %s2, %s180
      %s182 = smul.u32 14, %s18
      %v183 = vld [vmem:[%s171] sm:$0xff]
      %v184 = vld [vmem:[%s171 + $0x8] sm:$0xff]
      %v185 = vld [vmem:[%s171 + $0x10] sm:$0xff]
      %v186 = vld [vmem:[%s171 + $0x18] sm:$0xff]
      %v187 = vld [vmem:[%s171 + $0x20] sm:$0xff]
      %v188 = vld [vmem:[%s171 + $0x28] sm:$0xff]
      %v189 = vld [vmem:[%s171 + $0x30] sm:$0xff]
      %v190 = vld [vmem:[%s171 + $0x38] sm:$0xff]
      %v191 = vld [vmem:[%s171 + $0x40] sm:$0xff]
      %v192 = vld [vmem:[%s171 + $0x48] sm:$0xff]
      %v193 = vld [vmem:[%s171 + $0x50] sm:$0xff]
      %v194 = vld [vmem:[%s171 + $0x58] sm:$0xff]
      %v195 = vld [vmem:[%s171 + $0x60] sm:$0xff]
      %v196 = vld [vmem:[%s171 + $0x68] sm:$0xff]
      %v197 = vcvt.f32.s32.to.zero.pseudo %v183
      %v198 = vcvt.f32.s32.to.zero.pseudo %v184
      %v199 = vcvt.f32.s32.to.zero.pseudo %v185
      %v200 = vcvt.f32.s32.to.zero.pseudo %v186
      %v201 = vcvt.f32.s32.to.zero.pseudo %v187
      %v202 = vcvt.f32.s32.to.zero.pseudo %v188
      %v203 = vcvt.f32.s32.to.zero.pseudo %v189
      %v204 = vcvt.f32.s32.to.zero.pseudo %v190
      %v205 = vcvt.f32.s32.to.zero.pseudo %v191
      %v206 = vcvt.f32.s32.to.zero.pseudo %v192
      %v207 = vcvt.f32.s32.to.zero.pseudo %v193
      %v208 = vcvt.f32.s32.to.zero.pseudo %v194
      %v209 = vcvt.f32.s32.to.zero.pseudo %v195
      %v210 = vcvt.f32.s32.to.zero.pseudo %v196
      %s211 = smul.u32 %s18, 112
      %v212 = vlaneseq
      %v213 = vshrl.u32 %v212, 7
      %v214 = vadd.s32 %v213, 8
      %v215 = vadd.s32 %v213, 16
      %v216 = vadd.s32 %v213, 24
      %v217 = vadd.s32 %v213, 32
      %v218 = vadd.s32 %v213, 40
      %v219 = vadd.s32 %v213, 48
      %v220 = vadd.s32 %v213, 56
      %v221 = vadd.s32 %v213, 64
      %v222 = vadd.s32 %v213, 72
      %v223 = vadd.s32 %v213, 80
      %v224 = vadd.s32 %v213, 88
      %v225 = vadd.s32 %v213, 96
      %v226 = vadd.s32 %v213, 104
      %v227 = vstv %s211
      %v228 = vadd.s32 %v213, %v227
      %v229 = vadd.s32 %v214, %v227
      %v230 = vadd.s32 %v215, %v227
      %v231 = vadd.s32 %v216, %v227
      %v232 = vadd.s32 %v217, %v227
      %v233 = vadd.s32 %v218, %v227
      %v234 = vadd.s32 %v219, %v227
      %v235 = vadd.s32 %v220, %v227
      %v236 = vadd.s32 %v221, %v227
      %v237 = vadd.s32 %v222, %v227
      %v238 = vadd.s32 %v223, %v227
      %v239 = vadd.s32 %v224, %v227
      %v240 = vadd.s32 %v225, %v227
      %v241 = vadd.s32 %v226, %v227
      %vm242 = vcmp.lt.s32.totalorder %v228, 0
      %v243 = vsub.s32 0, %v228
      %v244 = vsel %vm242, %v243, %v228
      %v245 = vand.u32 %v244, 65535
      %v246 = vshrl.u32 %v244, 16
      %v248 = vmul.u32 %v245, 9362
      %v249 = vmul.u32 %v245, 37449
      %v250 = vmul.u32 %v246, 9362
      %v251 = vmul.u32 %v246, 37449
      %v252 = vshll.u32 %v249, 16
      %v253 = vshrl.u32 %v249, 16
      %v254 = vshll.u32 %v250, 16
      %v255 = vshrl.u32 %v250, 16
      %vm256 = vc.u32 %v248, %v252
      %v257 = vsel %vm256, 1, 0
      %v258 = vadd.s32 %v248, %v252
      %v259 = vadd.s32 %v251, %v257
      %vm260 = vc.u32 %v258, %v254
      %v261 = vsel %vm260, 1, 0
      %v262 = vadd.s32 %v258, %v254
      %v263 = vadd.s32 %v259, %v261
      %v264 = vadd.s32 %v263, %v253
      %v265 = vadd.s32 %v264, %v255
      %vm266 = vc.u32 %v262, 2454267026
      %v267 = vsel %vm266, 1, 0
      %v268 = vadd.s32 %v265, %v267
      %v269 = vshrl.u32 %v268, 3
      %v270 = vmul.u32 %v269, 14
      %v271 = vsub.s32 %v244, %v270
      %v272 = vsub.s32 0, %v271
      %v273 = vsel %vm242, %v272, %v271
      %vm274 = vcmp.lt.s32.totalorder %v229, 0
      %v275 = vsub.s32 0, %v229
      %v276 = vsel %vm274, %v275, %v229
      %v277 = vand.u32 %v276, 65535
      %v278 = vshrl.u32 %v276, 16
      %v280 = vmul.u32 %v277, 9362
      %v281 = vmul.u32 %v277, 37449
      %v282 = vmul.u32 %v278, 9362
      %v283 = vmul.u32 %v278, 37449
      %v284 = vshll.u32 %v281, 16
      %v285 = vshrl.u32 %v281, 16
      %v286 = vshll.u32 %v282, 16
      %v287 = vshrl.u32 %v282, 16
      %vm288 = vc.u32 %v280, %v284
      %v289 = vsel %vm288, 1, 0
      %v290 = vadd.s32 %v280, %v284
      %v291 = vadd.s32 %v283, %v289
      %vm292 = vc.u32 %v290, %v286
      %v293 = vsel %vm292, 1, 0
      %v294 = vadd.s32 %v290, %v286
      %v295 = vadd.s32 %v291, %v293
      %v296 = vadd.s32 %v295, %v285
      %v297 = vadd.s32 %v296, %v287
      %vm298 = vc.u32 %v294, 2454267026
      %v299 = vsel %vm298, 1, 0
      %v300 = vadd.s32 %v297, %v299
      %v301 = vshrl.u32 %v300, 3
      %v302 = vmul.u32 %v301, 14
      %v303 = vsub.s32 %v276, %v302
      %v304 = vsub.s32 0, %v303
      %v305 = vsel %vm274, %v304, %v303
      %vm306 = vcmp.lt.s32.totalorder %v230, 0
      %v307 = vsub.s32 0, %v230
      %v308 = vsel %vm306, %v307, %v230
      %v309 = vand.u32 %v308, 65535
      %v310 = vshrl.u32 %v308, 16
      %v312 = vmul.u32 %v309, 9362
      %v313 = vmul.u32 %v309, 37449
      %v314 = vmul.u32 %v310, 9362
      %v315 = vmul.u32 %v310, 37449
      %v316 = vshll.u32 %v313, 16
      %v317 = vshrl.u32 %v313, 16
      %v318 = vshll.u32 %v314, 16
      %v319 = vshrl.u32 %v314, 16
      %vm320 = vc.u32 %v312, %v316
      %v321 = vsel %vm320, 1, 0
      %v322 = vadd.s32 %v312, %v316
      %v323 = vadd.s32 %v315, %v321
      %vm324 = vc.u32 %v322, %v318
      %v325 = vsel %vm324, 1, 0
      %v326 = vadd.s32 %v322, %v318
      %v327 = vadd.s32 %v323, %v325
      %v328 = vadd.s32 %v327, %v317
      %v329 = vadd.s32 %v328, %v319
      %vm330 = vc.u32 %v326, 2454267026
      %v331 = vsel %vm330, 1, 0
      %v332 = vadd.s32 %v329, %v331
      %v333 = vshrl.u32 %v332, 3
      %v334 = vmul.u32 %v333, 14
      %v335 = vsub.s32 %v308, %v334
      %v336 = vsub.s32 0, %v335
      %v337 = vsel %vm306, %v336, %v335
      %vm338 = vcmp.lt.s32.totalorder %v231, 0
      %v339 = vsub.s32 0, %v231
      %v340 = vsel %vm338, %v339, %v231
      %v341 = vand.u32 %v340, 65535
      %v342 = vshrl.u32 %v340, 16
      %v344 = vmul.u32 %v341, 9362
      %v345 = vmul.u32 %v341, 37449
      %v346 = vmul.u32 %v342, 9362
      %v347 = vmul.u32 %v342, 37449
      %v348 = vshll.u32 %v345, 16
      %v349 = vshrl.u32 %v345, 16
      %v350 = vshll.u32 %v346, 16
      %v351 = vshrl.u32 %v346, 16
      %vm352 = vc.u32 %v344, %v348
      %v353 = vsel %vm352, 1, 0
      %v354 = vadd.s32 %v344, %v348
      %v355 = vadd.s32 %v347, %v353
      %vm356 = vc.u32 %v354, %v350
      %v357 = vsel %vm356, 1, 0
      %v358 = vadd.s32 %v354, %v350
      %v359 = vadd.s32 %v355, %v357
      %v360 = vadd.s32 %v359, %v349
      %v361 = vadd.s32 %v360, %v351
      %vm362 = vc.u32 %v358, 2454267026
      %v363 = vsel %vm362, 1, 0
      %v364 = vadd.s32 %v361, %v363
      %v365 = vshrl.u32 %v364, 3
      %v366 = vmul.u32 %v365, 14
      %v367 = vsub.s32 %v340, %v366
      %v368 = vsub.s32 0, %v367
      %v369 = vsel %vm338, %v368, %v367
      %vm370 = vcmp.lt.s32.totalorder %v232, 0
      %v371 = vsub.s32 0, %v232
      %v372 = vsel %vm370, %v371, %v232
      %v373 = vand.u32 %v372, 65535
      %v374 = vshrl.u32 %v372, 16
      %v376 = vmul.u32 %v373, 9362
      %v377 = vmul.u32 %v373, 37449
      %v378 = vmul.u32 %v374, 9362
      %v379 = vmul.u32 %v374, 37449
      %v380 = vshll.u32 %v377, 16
      %v381 = vshrl.u32 %v377, 16
      %v382 = vshll.u32 %v378, 16
      %v383 = vshrl.u32 %v378, 16
      %vm384 = vc.u32 %v376, %v380
      %v385 = vsel %vm384, 1, 0
      %v386 = vadd.s32 %v376, %v380
      %v387 = vadd.s32 %v379, %v385
      %vm388 = vc.u32 %v386, %v382
      %v389 = vsel %vm388, 1, 0
      %v390 = vadd.s32 %v386, %v382
      %v391 = vadd.s32 %v387, %v389
      %v392 = vadd.s32 %v391, %v381
      %v393 = vadd.s32 %v392, %v383
      %vm394 = vc.u32 %v390, 2454267026
      %v395 = vsel %vm394, 1, 0
      %v396 = vadd.s32 %v393, %v395
      %v397 = vshrl.u32 %v396, 3
      %v398 = vmul.u32 %v397, 14
      %v399 = vsub.s32 %v372, %v398
      %v400 = vsub.s32 0, %v399
      %v401 = vsel %vm370, %v400, %v399
      %vm402 = vcmp.lt.s32.totalorder %v233, 0
      %v403 = vsub.s32 0, %v233
      %v404 = vsel %vm402, %v403, %v233
      %v405 = vand.u32 %v404, 65535
      %v406 = vshrl.u32 %v404, 16
      %v408 = vmul.u32 %v405, 9362
      %v409 = vmul.u32 %v405, 37449
      %v410 = vmul.u32 %v406, 9362
      %v411 = vmul.u32 %v406, 37449
      %v412 = vshll.u32 %v409, 16
      %v413 = vshrl.u32 %v409, 16
      %v414 = vshll.u32 %v410, 16
      %v415 = vshrl.u32 %v410, 16
      %vm416 = vc.u32 %v408, %v412
      %v417 = vsel %vm416, 1, 0
      %v418 = vadd.s32 %v408, %v412
      %v419 = vadd.s32 %v411, %v417
      %vm420 = vc.u32 %v418, %v414
      %v421 = vsel %vm420, 1, 0
      %v422 = vadd.s32 %v418, %v414
      %v423 = vadd.s32 %v419, %v421
      %v424 = vadd.s32 %v423, %v413
      %v425 = vadd.s32 %v424, %v415
      %vm426 = vc.u32 %v422, 2454267026
      %v427 = vsel %vm426, 1, 0
      %v428 = vadd.s32 %v425, %v427
      %v429 = vshrl.u32 %v428, 3
      %v430 = vmul.u32 %v429, 14
      %v431 = vsub.s32 %v404, %v430
      %v432 = vsub.s32 0, %v431
      %v433 = vsel %vm402, %v432, %v431
      %vm434 = vcmp.lt.s32.totalorder %v234, 0
      %v435 = vsub.s32 0, %v234
      %v436 = vsel %vm434, %v435, %v234
      %v437 = vand.u32 %v436, 65535
      %v438 = vshrl.u32 %v436, 16
      %v440 = vmul.u32 %v437, 9362
      %v441 = vmul.u32 %v437, 37449
      %v442 = vmul.u32 %v438, 9362
      %v443 = vmul.u32 %v438, 37449
      %v444 = vshll.u32 %v441, 16
      %v445 = vshrl.u32 %v441, 16
      %v446 = vshll.u32 %v442, 16
      %v447 = vshrl.u32 %v442, 16
      %vm448 = vc.u32 %v440, %v444
      %v449 = vsel %vm448, 1, 0
      %v450 = vadd.s32 %v440, %v444
      %v451 = vadd.s32 %v443, %v449
      %vm452 = vc.u32 %v450, %v446
      %v453 = vsel %vm452, 1, 0
      %v454 = vadd.s32 %v450, %v446
      %v455 = vadd.s32 %v451, %v453
      %v456 = vadd.s32 %v455, %v445
      %v457 = vadd.s32 %v456, %v447
      %vm458 = vc.u32 %v454, 2454267026
      %v459 = vsel %vm458, 1, 0
      %v460 = vadd.s32 %v457, %v459
      %v461 = vshrl.u32 %v460, 3
      %v462 = vmul.u32 %v461, 14
      %v463 = vsub.s32 %v436, %v462
      %v464 = vsub.s32 0, %v463
      %v465 = vsel %vm434, %v464, %v463
      %vm466 = vcmp.lt.s32.totalorder %v235, 0
      %v467 = vsub.s32 0, %v235
      %v468 = vsel %vm466, %v467, %v235
      %v469 = vand.u32 %v468, 65535
      %v470 = vshrl.u32 %v468, 16
      %v472 = vmul.u32 %v469, 9362
      %v473 = vmul.u32 %v469, 37449
      %v474 = vmul.u32 %v470, 9362
      %v475 = vmul.u32 %v470, 37449
      %v476 = vshll.u32 %v473, 16
      %v477 = vshrl.u32 %v473, 16
      %v478 = vshll.u32 %v474, 16
      %v479 = vshrl.u32 %v474, 16
      %vm480 = vc.u32 %v472, %v476
      %v481 = vsel %vm480, 1, 0
      %v482 = vadd.s32 %v472, %v476
      %v483 = vadd.s32 %v475, %v481
      %vm484 = vc.u32 %v482, %v478
      %v485 = vsel %vm484, 1, 0
      %v486 = vadd.s32 %v482, %v478
      %v487 = vadd.s32 %v483, %v485
      %v488 = vadd.s32 %v487, %v477
      %v489 = vadd.s32 %v488, %v479
      %vm490 = vc.u32 %v486, 2454267026
      %v491 = vsel %vm490, 1, 0
      %v492 = vadd.s32 %v489, %v491
      %v493 = vshrl.u32 %v492, 3
      %v494 = vmul.u32 %v493, 14
      %v495 = vsub.s32 %v468, %v494
      %v496 = vsub.s32 0, %v495
      %v497 = vsel %vm466, %v496, %v495
      %vm498 = vcmp.lt.s32.totalorder %v236, 0
      %v499 = vsub.s32 0, %v236
      %v500 = vsel %vm498, %v499, %v236
      %v501 = vand.u32 %v500, 65535
      %v502 = vshrl.u32 %v500, 16
      %v504 = vmul.u32 %v501, 9362
      %v505 = vmul.u32 %v501, 37449
      %v506 = vmul.u32 %v502, 9362
      %v507 = vmul.u32 %v502, 37449
      %v508 = vshll.u32 %v505, 16
      %v509 = vshrl.u32 %v505, 16
      %v510 = vshll.u32 %v506, 16
      %v511 = vshrl.u32 %v506, 16
      %vm512 = vc.u32 %v504, %v508
      %v513 = vsel %vm512, 1, 0
      %v514 = vadd.s32 %v504, %v508
      %v515 = vadd.s32 %v507, %v513
      %vm516 = vc.u32 %v514, %v510
      %v517 = vsel %vm516, 1, 0
      %v518 = vadd.s32 %v514, %v510
      %v519 = vadd.s32 %v515, %v517
      %v520 = vadd.s32 %v519, %v509
      %v521 = vadd.s32 %v520, %v511
      %vm522 = vc.u32 %v518, 2454267026
      %v523 = vsel %vm522, 1, 0
      %v524 = vadd.s32 %v521, %v523
      %v525 = vshrl.u32 %v524, 3
      %v526 = vmul.u32 %v525, 14
      %v527 = vsub.s32 %v500, %v526
      %v528 = vsub.s32 0, %v527
      %v529 = vsel %vm498, %v528, %v527
      %vm530 = vcmp.lt.s32.totalorder %v237, 0
      %v531 = vsub.s32 0, %v237
      %v532 = vsel %vm530, %v531, %v237
      %v533 = vand.u32 %v532, 65535
      %v534 = vshrl.u32 %v532, 16
      %v536 = vmul.u32 %v533, 9362
      %v537 = vmul.u32 %v533, 37449
      %v538 = vmul.u32 %v534, 9362
      %v539 = vmul.u32 %v534, 37449
      %v540 = vshll.u32 %v537, 16
      %v541 = vshrl.u32 %v537, 16
      %v542 = vshll.u32 %v538, 16
      %v543 = vshrl.u32 %v538, 16
      %vm544 = vc.u32 %v536, %v540
      %v545 = vsel %vm544, 1, 0
      %v546 = vadd.s32 %v536, %v540
      %v547 = vadd.s32 %v539, %v545
      %vm548 = vc.u32 %v546, %v542
      %v549 = vsel %vm548, 1, 0
      %v550 = vadd.s32 %v546, %v542
      %v551 = vadd.s32 %v547, %v549
      %v552 = vadd.s32 %v551, %v541
      %v553 = vadd.s32 %v552, %v543
      %vm554 = vc.u32 %v550, 2454267026
      %v555 = vsel %vm554, 1, 0
      %v556 = vadd.s32 %v553, %v555
      %v557 = vshrl.u32 %v556, 3
      %v558 = vmul.u32 %v557, 14
      %v559 = vsub.s32 %v532, %v558
      %v560 = vsub.s32 0, %v559
      %v561 = vsel %vm530, %v560, %v559
      %vm562 = vcmp.lt.s32.totalorder %v238, 0
      %v563 = vsub.s32 0, %v238
      %v564 = vsel %vm562, %v563, %v238
      %v565 = vand.u32 %v564, 65535
      %v566 = vshrl.u32 %v564, 16
      %v568 = vmul.u32 %v565, 9362
      %v569 = vmul.u32 %v565, 37449
      %v570 = vmul.u32 %v566, 9362
      %v571 = vmul.u32 %v566, 37449
      %v572 = vshll.u32 %v569, 16
      %v573 = vshrl.u32 %v569, 16
      %v574 = vshll.u32 %v570, 16
      %v575 = vshrl.u32 %v570, 16
      %vm576 = vc.u32 %v568, %v572
      %v577 = vsel %vm576, 1, 0
      %v578 = vadd.s32 %v568, %v572
      %v579 = vadd.s32 %v571, %v577
      %vm580 = vc.u32 %v578, %v574
      %v581 = vsel %vm580, 1, 0
      %v582 = vadd.s32 %v578, %v574
      %v583 = vadd.s32 %v579, %v581
      %v584 = vadd.s32 %v583, %v573
      %v585 = vadd.s32 %v584, %v575
      %vm586 = vc.u32 %v582, 2454267026
      %v587 = vsel %vm586, 1, 0
      %v588 = vadd.s32 %v585, %v587
      %v589 = vshrl.u32 %v588, 3
      %v590 = vmul.u32 %v589, 14
      %v591 = vsub.s32 %v564, %v590
      %v592 = vsub.s32 0, %v591
      %v593 = vsel %vm562, %v592, %v591
      %vm594 = vcmp.lt.s32.totalorder %v239, 0
      %v595 = vsub.s32 0, %v239
      %v596 = vsel %vm594, %v595, %v239
      %v597 = vand.u32 %v596, 65535
      %v598 = vshrl.u32 %v596, 16
      %v600 = vmul.u32 %v597, 9362
      %v601 = vmul.u32 %v597, 37449
      %v602 = vmul.u32 %v598, 9362
      %v603 = vmul.u32 %v598, 37449
      %v604 = vshll.u32 %v601, 16
      %v605 = vshrl.u32 %v601, 16
      %v606 = vshll.u32 %v602, 16
      %v607 = vshrl.u32 %v602, 16
      %vm608 = vc.u32 %v600, %v604
      %v609 = vsel %vm608, 1, 0
      %v610 = vadd.s32 %v600, %v604
      %v611 = vadd.s32 %v603, %v609
      %vm612 = vc.u32 %v610, %v606
      %v613 = vsel %vm612, 1, 0
      %v614 = vadd.s32 %v610, %v606
      %v615 = vadd.s32 %v611, %v613
      %v616 = vadd.s32 %v615, %v605
      %v617 = vadd.s32 %v616, %v607
      %vm618 = vc.u32 %v614, 2454267026
      %v619 = vsel %vm618, 1, 0
      %v620 = vadd.s32 %v617, %v619
      %v621 = vshrl.u32 %v620, 3
      %v622 = vmul.u32 %v621, 14
      %v623 = vsub.s32 %v596, %v622
      %v624 = vsub.s32 0, %v623
      %v625 = vsel %vm594, %v624, %v623
      %vm626 = vcmp.lt.s32.totalorder %v240, 0
      %v627 = vsub.s32 0, %v240
      %v628 = vsel %vm626, %v627, %v240
      %v629 = vand.u32 %v628, 65535
      %v630 = vshrl.u32 %v628, 16
      %v632 = vmul.u32 %v629, 9362
      %v633 = vmul.u32 %v629, 37449
      %v634 = vmul.u32 %v630, 9362
      %v635 = vmul.u32 %v630, 37449
      %v636 = vshll.u32 %v633, 16
      %v637 = vshrl.u32 %v633, 16
      %v638 = vshll.u32 %v634, 16
      %v639 = vshrl.u32 %v634, 16
      %vm640 = vc.u32 %v632, %v636
      %v641 = vsel %vm640, 1, 0
      %v642 = vadd.s32 %v632, %v636
      %v643 = vadd.s32 %v635, %v641
      %vm644 = vc.u32 %v642, %v638
      %v645 = vsel %vm644, 1, 0
      %v646 = vadd.s32 %v642, %v638
      %v647 = vadd.s32 %v643, %v645
      %v648 = vadd.s32 %v647, %v637
      %v649 = vadd.s32 %v648, %v639
      %vm650 = vc.u32 %v646, 2454267026
      %v651 = vsel %vm650, 1, 0
      %v652 = vadd.s32 %v649, %v651
      %v653 = vshrl.u32 %v652, 3
      %v654 = vmul.u32 %v653, 14
      %v655 = vsub.s32 %v628, %v654
      %v656 = vsub.s32 0, %v655
      %v657 = vsel %vm626, %v656, %v655
      %vm658 = vcmp.lt.s32.totalorder %v241, 0
      %v659 = vsub.s32 0, %v241
      %v660 = vsel %vm658, %v659, %v241
      %v661 = vand.u32 %v660, 65535
      %v662 = vshrl.u32 %v660, 16
      %v664 = vmul.u32 %v661, 9362
      %v665 = vmul.u32 %v661, 37449
      %v666 = vmul.u32 %v662, 9362
      %v667 = vmul.u32 %v662, 37449
      %v668 = vshll.u32 %v665, 16
      %v669 = vshrl.u32 %v665, 16
      %v670 = vshll.u32 %v666, 16
      %v671 = vshrl.u32 %v666, 16
      %vm672 = vc.u32 %v664, %v668
      %v673 = vsel %vm672, 1, 0
      %v674 = vadd.s32 %v664, %v668
      %v675 = vadd.s32 %v667, %v673
      %vm676 = vc.u32 %v674, %v670
      %v677 = vsel %vm676, 1, 0
      %v678 = vadd.s32 %v674, %v670
      %v679 = vadd.s32 %v675, %v677
      %v680 = vadd.s32 %v679, %v669
      %v681 = vadd.s32 %v680, %v671
      %vm682 = vc.u32 %v678, 2454267026
      %v683 = vsel %vm682, 1, 0
      %v684 = vadd.s32 %v681, %v683
      %v685 = vshrl.u32 %v684, 3
      %v686 = vmul.u32 %v685, 14
      %v687 = vsub.s32 %v660, %v686
      %v688 = vsub.s32 0, %v687
      %v689 = vsel %vm658, %v688, %v687
      %vm690 = vcmp.ne.s32.totalorder %v273, 0
      %vm691 = vcmp.ne.s32.totalorder %v305, 0
      %vm692 = vcmp.ne.s32.totalorder %v337, 0
      %vm693 = vcmp.ne.s32.totalorder %v369, 0
      %vm694 = vcmp.ne.s32.totalorder %v401, 0
      %vm695 = vcmp.ne.s32.totalorder %v433, 0
      %vm696 = vcmp.ne.s32.totalorder %v465, 0
      %vm697 = vcmp.ne.s32.totalorder %v497, 0
      %vm698 = vcmp.ne.s32.totalorder %v529, 0
      %vm699 = vcmp.ne.s32.totalorder %v561, 0
      %vm700 = vcmp.ne.s32.totalorder %v593, 0
      %vm701 = vcmp.ne.s32.totalorder %v625, 0
      %vm702 = vcmp.ne.s32.totalorder %v657, 0
      %vm703 = vcmp.ne.s32.totalorder %v689, 0
      %vm704 = vcmp.lt.s32.totalorder %v273, 0
      %vm705 = vcmp.lt.s32.totalorder %v305, 0
      %vm706 = vcmp.lt.s32.totalorder %v337, 0
      %vm707 = vcmp.lt.s32.totalorder %v369, 0
      %vm708 = vcmp.lt.s32.totalorder %v401, 0
      %vm709 = vcmp.lt.s32.totalorder %v433, 0
      %vm710 = vcmp.lt.s32.totalorder %v465, 0
      %vm711 = vcmp.lt.s32.totalorder %v497, 0
      %vm712 = vcmp.lt.s32.totalorder %v529, 0
      %vm713 = vcmp.lt.s32.totalorder %v561, 0
      %vm714 = vcmp.lt.s32.totalorder %v593, 0
      %vm715 = vcmp.lt.s32.totalorder %v625, 0
      %vm716 = vcmp.lt.s32.totalorder %v657, 0
      %vm717 = vcmp.lt.s32.totalorder %v689, 0
      %vm718 = vmand %vm704, %vm690
      %vm719 = vmand %vm705, %vm691
      %vm720 = vmand %vm706, %vm692
      %vm721 = vmand %vm707, %vm693
      %vm722 = vmand %vm708, %vm694
      %vm723 = vmand %vm709, %vm695
      %vm724 = vmand %vm710, %vm696
      %vm725 = vmand %vm711, %vm697
      %vm726 = vmand %vm712, %vm698
      %vm727 = vmand %vm713, %vm699
      %vm728 = vmand %vm714, %vm700
      %vm729 = vmand %vm715, %vm701
      %vm730 = vmand %vm716, %vm702
      %vm731 = vmand %vm717, %vm703
      %v732 = vadd.s32 %v273, 14
      %v733 = vadd.s32 %v305, 14
      %v734 = vadd.s32 %v337, 14
      %v735 = vadd.s32 %v369, 14
      %v736 = vadd.s32 %v401, 14
      %v737 = vadd.s32 %v433, 14
      %v738 = vadd.s32 %v465, 14
      %v739 = vadd.s32 %v497, 14
      %v740 = vadd.s32 %v529, 14
      %v741 = vadd.s32 %v561, 14
      %v742 = vadd.s32 %v593, 14
      %v743 = vadd.s32 %v625, 14
      %v744 = vadd.s32 %v657, 14
      %v745 = vadd.s32 %v689, 14
      %v746 = vsel %vm718, %v732, %v273
      %v747 = vsel %vm719, %v733, %v305
      %v748 = vsel %vm720, %v734, %v337
      %v749 = vsel %vm721, %v735, %v369
      %v750 = vsel %vm722, %v736, %v401
      %v751 = vsel %vm723, %v737, %v433
      %v752 = vsel %vm724, %v738, %v465
      %v753 = vsel %vm725, %v739, %v497
      %v754 = vsel %vm726, %v740, %v529
      %v755 = vsel %vm727, %v741, %v561
      %v756 = vsel %vm728, %v742, %v593
      %v757 = vsel %vm729, %v743, %v625
      %v758 = vsel %vm730, %v744, %v657
      %v759 = vsel %vm731, %v745, %v689
      %v760 = vadd.s32 %v746, 21
      %v761 = vadd.s32 %v747, 21
      %v762 = vadd.s32 %v748, 21
      %v763 = vadd.s32 %v749, 21
      %v764 = vadd.s32 %v750, 21
      %v765 = vadd.s32 %v751, 21
      %v766 = vadd.s32 %v752, 21
      %v767 = vadd.s32 %v753, 21
      %v768 = vadd.s32 %v754, 21
      %v769 = vadd.s32 %v755, 21
      %v770 = vadd.s32 %v756, 21
      %v771 = vadd.s32 %v757, 21
      %v772 = vadd.s32 %v758, 21
      %v773 = vadd.s32 %v759, 21
      %v774 = vlaneseq
      %v775 = vand.u32 %v774, 127
      %776 = vset.pattern.permute.xlu0 3
      %777 = vperm.xlu0 %776, %v197
      %v778 = vpop.permute.xlu0 %777
      %779 = vset.pattern.permute.xlu0 3
      %780 = vperm.xlu0 %779, %v198
      %v781 = vpop.permute.xlu0 %780
      %782 = vset.pattern.permute.xlu0 3
      %783 = vperm.xlu0 %782, %v199
      %v784 = vpop.permute.xlu0 %783
      %785 = vset.pattern.permute.xlu0 3
      %786 = vperm.xlu0 %785, %v200
      %v787 = vpop.permute.xlu0 %786
      %788 = vset.pattern.permute.xlu0 3
      %789 = vperm.xlu0 %788, %v201
      %v790 = vpop.permute.xlu0 %789
      %791 = vset.pattern.permute.xlu0 3
      %792 = vperm.xlu0 %791, %v202
      %v793 = vpop.permute.xlu0 %792
      %794 = vset.pattern.permute.xlu0 3
      %795 = vperm.xlu0 %794, %v203
      %v796 = vpop.permute.xlu0 %795
      %797 = vset.pattern.permute.xlu0 3
      %798 = vperm.xlu0 %797, %v204
      %v799 = vpop.permute.xlu0 %798
      %800 = vset.pattern.permute.xlu0 3
      %801 = vperm.xlu0 %800, %v205
      %v802 = vpop.permute.xlu0 %801
      %803 = vset.pattern.permute.xlu0 3
      %804 = vperm.xlu0 %803, %v206
      %v805 = vpop.permute.xlu0 %804
      %806 = vset.pattern.permute.xlu0 3
      %807 = vperm.xlu0 %806, %v207
      %v808 = vpop.permute.xlu0 %807
      %809 = vset.pattern.permute.xlu0 3
      %810 = vperm.xlu0 %809, %v208
      %v811 = vpop.permute.xlu0 %810
      %812 = vset.pattern.permute.xlu0 3
      %813 = vperm.xlu0 %812, %v209
      %v814 = vpop.permute.xlu0 %813
      %815 = vset.pattern.permute.xlu0 3
      %816 = vperm.xlu0 %815, %v210
      %v817 = vpop.permute.xlu0 %816
      %vm818 = vcmp.eq.s32.totalorder %v775, %v778
      %vm819 = vcmp.eq.s32.totalorder %v775, %v781
      %vm820 = vcmp.eq.s32.totalorder %v775, %v784
      %vm821 = vcmp.eq.s32.totalorder %v775, %v787
      %vm822 = vcmp.eq.s32.totalorder %v775, %v790
      %vm823 = vcmp.eq.s32.totalorder %v775, %v793
      %vm824 = vcmp.eq.s32.totalorder %v775, %v796
      %vm825 = vcmp.eq.s32.totalorder %v775, %v799
      %vm826 = vcmp.eq.s32.totalorder %v775, %v802
      %vm827 = vcmp.eq.s32.totalorder %v775, %v805
      %vm828 = vcmp.eq.s32.totalorder %v775, %v808
      %vm829 = vcmp.eq.s32.totalorder %v775, %v811
      %vm830 = vcmp.eq.s32.totalorder %v775, %v814
      %vm831 = vcmp.eq.s32.totalorder %v775, %v817
      %vm832 = vcmp.eq.s32.totalorder %v775, %v760
      %vm833 = vcmp.eq.s32.totalorder %v775, %v761
      %vm834 = vcmp.eq.s32.totalorder %v775, %v762
      %vm835 = vcmp.eq.s32.totalorder %v775, %v763
      %vm836 = vcmp.eq.s32.totalorder %v775, %v764
      %vm837 = vcmp.eq.s32.totalorder %v775, %v765
      %vm838 = vcmp.eq.s32.totalorder %v775, %v766
      %vm839 = vcmp.eq.s32.totalorder %v775, %v767
      %vm840 = vcmp.eq.s32.totalorder %v775, %v768
      %vm841 = vcmp.eq.s32.totalorder %v775, %v769
      %vm842 = vcmp.eq.s32.totalorder %v775, %v770
      %vm843 = vcmp.eq.s32.totalorder %v775, %v771
      %vm844 = vcmp.eq.s32.totalorder %v775, %v772
      %vm845 = vcmp.eq.s32.totalorder %v775, %v773
      %vm846 = vmor %vm818, %vm832
      %vm847 = vmor %vm819, %vm833
      %vm848 = vmor %vm820, %vm834
      %vm849 = vmor %vm821, %vm835
      %vm850 = vmor %vm822, %vm836
      %vm851 = vmor %vm823, %vm837
      %vm852 = vmor %vm824, %vm838
      %vm853 = vmor %vm825, %vm839
      %vm854 = vmor %vm826, %vm840
      %vm855 = vmor %vm827, %vm841
      %vm856 = vmor %vm828, %vm842
      %vm857 = vmor %vm829, %vm843
      %vm858 = vmor %vm830, %vm844
      %vm859 = vmor %vm831, %vm845
      %v860 = vsel %vm846, 1, 0
      %v861 = vsel %vm847, 1, 0
      %v862 = vsel %vm848, 1, 0
      %v863 = vsel %vm849, 1, 0
      %v864 = vsel %vm850, 1, 0
      %v865 = vsel %vm851, 1, 0
      %v866 = vsel %vm852, 1, 0
      %v867 = vsel %vm853, 1, 0
      %v868 = vsel %vm854, 1, 0
      %v869 = vsel %vm855, 1, 0
      %v870 = vsel %vm856, 1, 0
      %v871 = vsel %vm857, 1, 0
      %v872 = vsel %vm858, 1, 0
      %v873 = vsel %vm859, 1, 0
      %v874 = vcvt.s32.f32 %v860
      %v875 = vcvt.s32.f32 %v861
      %v876 = vcvt.s32.f32 %v862
      %v877 = vcvt.s32.f32 %v863
      %v878 = vcvt.s32.f32 %v864
      %v879 = vcvt.s32.f32 %v865
      %v880 = vcvt.s32.f32 %v866
      %v881 = vcvt.s32.f32 %v867
      %v882 = vcvt.s32.f32 %v868
      %v883 = vcvt.s32.f32 %v869
      %v884 = vcvt.s32.f32 %v870
      %v885 = vcvt.s32.f32 %v871
      %v886 = vcvt.s32.f32 %v872
      %v887 = vcvt.s32.f32 %v873
      %v888 = vld [vmem:[%s1] sm:$0xff]
      %v889 = vld [vmem:[%s1 + $0x8] sm:$0xff]
      %v890 = vld [vmem:[%s1 + $0x10] sm:$0xff]
      %v891 = vld [vmem:[%s1 + $0x18] sm:$0xff]
      %v892 = vld [vmem:[%s1 + $0x20] sm:$0x7]
      %vm893 = vcmask 285696
      %v895 = vsel %vm893, %v874, 0
      %v898 = vsel %vm893, %v875, 0
      %v901 = vsel %vm893, %v876, 0
      %v904 = vsel %vm893, %v877, 0
      %v907 = vsel %vm893, %v878, 0
      %v910 = vsel %vm893, %v879, 0
      %v913 = vsel %vm893, %v880, 0
      %v916 = vsel %vm893, %v881, 0
      %v919 = vsel %vm893, %v882, 0
      %v922 = vsel %vm893, %v883, 0
      %v925 = vsel %vm893, %v884, 0
      %v928 = vsel %vm893, %v885, 0
      %v931 = vsel %vm893, %v886, 0
      %v934 = vsel %vm893, %v887, 0
      %vm936 = vcmask 1042432
      %v938 = vsel %vm936, %v892, 0
      %940 = vmatpush.msra.mxu0 0.0
      %941 = vmatpush.msra.mxu0 0.0
      %942 = vmatpush.msra.mxu0 0.0
      %943 = vmatpush.msra.mxu0 0.0
      %944 = vmatpush.msra.mxu0 0.0
      %945 = vmatpush.msra.mxu0 0.0
      %946 = vmatpush.msra.mxu0 0.0
      %947 = vmatpush.msra.mxu0 0.0
      %948 = vmatpush.msra.mxu0 0.0
      %949 = vmatpush.msra.mxu0 0.0
      %950 = vmatpush.msra.mxu0 0.0
      %951 = vmatpush.msra.mxu0 %v938
      %952 = vmatpush.msra.mxu0 %v891
      %953 = vmatpush.msra.mxu0 %v890
      %954 = vmatpush.msra.mxu0 %v889
      %955 = vmatpush.msra.mxu0 %v888
      %956 = vmatmul.f32.gmra.mxu0 %v895
      %v957 = vpop.f32.mrf.mxu0
      %v958 = vadd.f32 0.0, %v957
      %959 = vmatmul.f32.gmra.mxu0 %v898
      %v960 = vpop.f32.mrf.mxu0
      %v961 = vadd.f32 0.0, %v960
      %962 = vmatmul.f32.gmra.mxu0 %v901
      %v963 = vpop.f32.mrf.mxu0
      %v964 = vadd.f32 0.0, %v963
      %965 = vmatmul.f32.gmra.mxu0 %v904
      %v966 = vpop.f32.mrf.mxu0
      %v967 = vadd.f32 0.0, %v966
      %968 = vmatmul.f32.gmra.mxu0 %v907
      %v969 = vpop.f32.mrf.mxu0
      %v970 = vadd.f32 0.0, %v969
      %971 = vmatmul.f32.gmra.mxu0 %v910
      %v972 = vpop.f32.mrf.mxu0
      %v973 = vadd.f32 0.0, %v972
      %974 = vmatmul.f32.gmra.mxu0 %v913
      %v975 = vpop.f32.mrf.mxu0
      %v976 = vadd.f32 0.0, %v975
      %977 = vmatmul.f32.gmra.mxu0 %v916
      %v978 = vpop.f32.mrf.mxu0
      %v979 = vadd.f32 0.0, %v978
      %980 = vmatmul.f32.gmra.mxu0 %v919
      %v981 = vpop.f32.mrf.mxu0
      %v982 = vadd.f32 0.0, %v981
      %983 = vmatmul.f32.gmra.mxu0 %v922
      %v984 = vpop.f32.mrf.mxu0
      %v985 = vadd.f32 0.0, %v984
      %986 = vmatmul.f32.gmra.mxu0 %v925
      %v987 = vpop.f32.mrf.mxu0
      %v988 = vadd.f32 0.0, %v987
      %989 = vmatmul.f32.gmra.mxu0 %v928
      %v990 = vpop.f32.mrf.mxu0
      %v991 = vadd.f32 0.0, %v990
      %992 = vmatmul.f32.gmra.mxu0 %v931
      %v993 = vpop.f32.mrf.mxu0
      %v994 = vadd.f32 0.0, %v993
      %995 = vmatmul.f32.gmra.mxu0 %v934
      %v996 = vpop.f32.mrf.mxu0
      %v997 = vadd.f32 0.0, %v996
      %998 = vdwg.mxu0
      %1013 = vrot.lane.b32.xlu0 %v183, 29
      %v1014 = vpop.permute.xlu0 %1013
      %1015 = vrot.lane.b32.xlu0 %v184, 29
      %v1016 = vpop.permute.xlu0 %1015
      %1017 = vrot.lane.b32.xlu0 %v185, 29
      %v1018 = vpop.permute.xlu0 %1017
      %1019 = vrot.lane.b32.xlu0 %v186, 29
      %v1020 = vpop.permute.xlu0 %1019
      %1021 = vrot.lane.b32.xlu0 %v187, 29
      %v1022 = vpop.permute.xlu0 %1021
      %1023 = vrot.lane.b32.xlu0 %v188, 29
      %v1024 = vpop.permute.xlu0 %1023
      %1025 = vrot.lane.b32.xlu0 %v189, 29
      %v1026 = vpop.permute.xlu0 %1025
      %1027 = vrot.lane.b32.xlu0 %v190, 29
      %v1028 = vpop.permute.xlu0 %1027
      %1029 = vrot.lane.b32.xlu0 %v191, 29
      %v1030 = vpop.permute.xlu0 %1029
      %1031 = vrot.lane.b32.xlu0 %v192, 29
      %v1032 = vpop.permute.xlu0 %1031
      %1033 = vrot.lane.b32.xlu0 %v193, 29
      %v1034 = vpop.permute.xlu0 %1033
      %1035 = vrot.lane.b32.xlu0 %v194, 29
      %v1036 = vpop.permute.xlu0 %1035
      %1037 = vrot.lane.b32.xlu0 %v195, 29
      %v1038 = vpop.permute.xlu0 %1037
      %1039 = vrot.lane.b32.xlu0 %v196, 29
      %v1040 = vpop.permute.xlu0 %1039
      %vm1055 = vcmask 236544
      %v1056 = vsel %vm1055, %v958, %v1014
      %v1057 = vsel %vm1055, %v961, %v1016
      %v1058 = vsel %vm1055, %v964, %v1018
      %v1059 = vsel %vm1055, %v967, %v1020
      %v1060 = vsel %vm1055, %v970, %v1022
      %v1061 = vsel %vm1055, %v973, %v1024
      %v1062 = vsel %vm1055, %v976, %v1026
      %v1063 = vsel %vm1055, %v979, %v1028
      %v1064 = vsel %vm1055, %v982, %v1030
      %v1065 = vsel %vm1055, %v985, %v1032
      %v1066 = vsel %vm1055, %v988, %v1034
      %v1067 = vsel %vm1055, %v991, %v1036
      %v1068 = vsel %vm1055, %v994, %v1038
      %v1069 = vsel %vm1055, %v997, %v1040
      %vm1070 = vcmask 261120
      %1071 = vst.msk [vmem:[%s181] sm:$0xff] %vm1070, %v1056
      %1072 = vst.msk [vmem:[%s181 + $0x8] sm:$0xff] %vm1070, %v1057
      %1073 = vst.msk [vmem:[%s181 + $0x10] sm:$0xff] %vm1070, %v1058
      %1074 = vst.msk [vmem:[%s181 + $0x18] sm:$0xff] %vm1070, %v1059
      %1075 = vst.msk [vmem:[%s181 + $0x20] sm:$0xff] %vm1070, %v1060
      %1076 = vst.msk [vmem:[%s181 + $0x28] sm:$0xff] %vm1070, %v1061
      %1077 = vst.msk [vmem:[%s181 + $0x30] sm:$0xff] %vm1070, %v1062
      %1078 = vst.msk [vmem:[%s181 + $0x38] sm:$0xff] %vm1070, %v1063
      %1079 = vst.msk [vmem:[%s181 + $0x40] sm:$0xff] %vm1070, %v1064
      %1080 = vst.msk [vmem:[%s181 + $0x48] sm:$0xff] %vm1070, %v1065
      %1081 = vst.msk [vmem:[%s181 + $0x50] sm:$0xff] %vm1070, %v1066
      %1082 = vst.msk [vmem:[%s181 + $0x58] sm:$0xff] %vm1070, %v1067
      %1083 = vst.msk [vmem:[%s181 + $0x60] sm:$0xff] %vm1070, %v1068
      %1084 = vst.msk [vmem:[%s181 + $0x68] sm:$0xff] %vm1070, %v1069
      %s1085 = smul.u32 14, %s18
      %p1086 = scmp.lt.s32.totalorder %s17, 1
      %s1087 = scalar_select %p1086, %s17, 1
      %p1088 = scmp.lt.s32.totalorder %s1085, 13
      %s1089 = scalar_select %p1088, %s1085, 13
      %s1090 = smul.addr %s1087, 14
      %s1091 = sadd.s32 %s1089, %s1090
      %s1092 = smul.addr %s1091, 8
      %s1093 = scalar_lea.vmem %s2, %s1092
      // Predicated region
      $region29: #{_forward.2} parent=27 // pred_check
        %p1094 = pneg %p94
      $region30: #{_forward.2} parent=27 // pred_check_branch
        %1096 = sbr.rel (%p1094) target = $region32
      $region31: #{_forward.2} parent=27 // pred_region
        %s1097 = smul.u32 14, %s18
      $region32: #{_forward.2} parent=27 // pred_fallthru
        _
    $region28: #{_forward.2} parent=5 // pred_fallthru
      _
    %p1098 = scmp.le.s32.totalorder 2, %s8
    // Predicated region
    $region33: #{_forward.2} parent=5 // pred_check
      %p1099 = pneg %p1098
    $region34: #{_forward.2} parent=5 // pred_check_branch
      %1101 = sbr.rel (%p1099) target = $region36
    $region35: #{_forward.2} parent=5 // pred_region
      %s1102 = ssub.s32 %s8, 2
      // Predicated region
      $region37: #{_forward.2} parent=35 // pred_check
        %p1103 = pneg %p100
      $region38: #{_forward.2} parent=35 // pred_check_branch
        %1105 = sbr.rel (%p1103) target = $region40
      $region39: #{_forward.2} parent=35 // pred_region
        %s1106 = smul.u32 14, %s20
        %p1107 = scmp.lt.s32.totalorder %s19, 1
        %s1108 = scalar_select %p1107, %s19, 1
        %p1109 = scmp.lt.s32.totalorder %s1106, 13
        %s1110 = scalar_select %p1109, %s1106, 13
        %s1111 = smul.addr %s1108, 14
        %s1112 = sadd.s32 %s1110, %s1111
        %s1113 = smul.addr %s1112, 8
        %s1114 = scalar_lea.vmem %s2, %s1113
      $region40: #{_forward.2} parent=35 // pred_fallthru
        _
    $region36: #{_forward.2} parent=5 // pred_fallthru
      _
  $region6: #{_forward.2} parent=0 // loop_footer
    %s12 = sadd.s32 1, %s8
  $region7: #{_forward.2} parent=0 // loop_footer_branch
    %7 = sbr.rel target = $region3
  $region8: #{_forward.2} parent=0 // loop_exit
    _

</llo_original>
